<compile_context>
chip_gen: v7x
topology: tpu7x:2x2x1
jax: 0.10.0
libtpu: 0.0.40
codegen_flags: <defaults>
</compile_context>

<pallas_src>
import functools
import math

import jax
import jax.numpy as jnp
from jax.experimental import pallas as pl
from jax.experimental.pallas import tpu as pltpu

FEAT_C = 1280  # feature width fixed by the module's Linear(1280, num_classes)


# ---------------------------------------------------------------------------
# Helpers
# ---------------------------------------------------------------------------
def _round_up(v, m):
    return -(-v // m) * m


def _vmem_capacity_bytes():
    """Per-TensorCore VMEM capacity; conservative fallback if the query fails."""
    try:
        return int(pltpu.get_tpu_info().vmem_capacity_bytes)
    except Exception:
        return 64 << 20  # v7x per-TC size (the smallest current generation)


def _pick_tm(hw, cap):
    """Largest multiple-of-8 divisor of H*W that is <= cap (rows per grid step)."""
    for cand in range(min(int(cap), hw), 7, -1):
        if hw % cand == 0 and cand % 8 == 0:
            return cand
    return hw  # tiny / odd spatial extents: take the whole image in one step


# ---------------------------------------------------------------------------
# Fused kernel: conv (BN scale folded) + shift + ReLU + global avg pool + Linear
# ---------------------------------------------------------------------------
def _fused_forward_kernel(a_ref, w_ref, shift_ref, fcw_ref, fcb_ref, o_ref,
                          acc_ref, *, inv_hw):
    """Grid step (n, t): matmul one im2col row tile against the resident conv
    weights, add the BN shift, ReLU, and accumulate the spatial column sum in a
    VMEM f32 scratch.  On the last row tile, turn the sum into the spatial mean
    and apply the Linear classifier, emitting logits directly."""
    t = pl.program_id(1)

    @pl.when(t == 0)
    def _init():
        acc_ref[...] = jnp.zeros_like(acc_ref)

    # (tm, K) bf16 @ (K, 1280) bf16 -> f32 on the MXU.  The BN scale is folded
    # into w_ref, so the epilogue is just add-shift + ReLU + row-sum.
    y = jnp.dot(a_ref[...], w_ref[...], preferred_element_type=jnp.float32)
    y = jnp.maximum(y + shift_ref[...], 0.0)                 # BN shift + ReLU (f32)
    acc_ref[...] += jnp.sum(y, axis=0, keepdims=True)        # partial spatial sum

    @pl.when(t == pl.num_programs(1) - 1)
    def _finalize():
        pooled = (acc_ref[...] * inv_hw).astype(jnp.bfloat16)        # (1, 1280)
        logits = jnp.dot(pooled, fcw_ref[...],
                         preferred_element_type=jnp.float32)         # (1, c_pad)
        o_ref[...] = logits + fcb_ref[...]


def fused_conv_bn_relu_gap_fc(x_nhwc, conv_w_oihw, bn_scale, bn_shift, fc_w, fc_b):
    """3x3 'same' conv (no bias) + eval BN + ReLU + mean over (H, W) + Linear.

    Returns logits (N, num_classes) float32.  Only the logits are written to HBM."""
    N, H, W, Cin = x_nhwc.shape
    Cout = conv_w_oihw.shape[0]
    assert Cout == FEAT_C
    num_classes = fc_w.shape[1]
    HW = H * W

    # --- glue: im2col patches in bf16, shape (N, H*W, 9*Cin) ------------------
    # TODO(synk): gather the 3x3 taps inside the kernel (halo'd row-tile DMA from
    # an NHWC HBM ref with memory_space=pl.ANY) to remove the remaining ~9x
    # inflation of the *input*-side HBM traffic; with Cout tiling removed this is
    # the last big memory lever.
    xb = x_nhwc.astype(jnp.bfloat16)
    xp = jnp.pad(xb, ((0, 0), (1, 1), (1, 1), (0, 0)))
    patches = [xp[:, dh:dh + H, dw:dw + W, :] for dh in range(3) for dw in range(3)]
    a = jnp.concatenate(patches, axis=-1).reshape(N, HW, 9 * Cin)

    k = 9 * Cin
    k16 = _round_up(k, 16)     # minimal pad: bf16 sublane packing of the weight matrix
    k128 = _round_up(k, 128)   # lane-aligned activation loads
    # Lane-align K only when it costs <= 25% extra A bytes (review trade-off).
    k_pad = k128 if k128 * 4 <= k16 * 5 else k16
    if k_pad != k:
        a = jnp.pad(a, ((0, 0), (0, 0), (0, k_pad - k)))

    # PyTorch conv weight [Cout, Cin, 3, 3] -> [(kh, kw, Cin) = K, Cout], with the
    # eval-mode BN scale folded in (multiplied in f32 *before* the bf16 cast).
    w_folded = conv_w_oihw * bn_scale.reshape(Cout, 1, 1, 1)
    wmat = jnp.transpose(w_folded, (2, 3, 1, 0)).reshape(k, Cout)
    if k_pad != k:
        wmat = jnp.pad(wmat, ((0, k_pad - k), (0, 0)))
    wmat = wmat.astype(jnp.bfloat16)

    shift = bn_shift.reshape(1, Cout).astype(jnp.float32)

    # Classifier weights: pad classes to 128 lanes (lane-dense store), bf16 operands.
    c_pad = _round_up(max(num_classes, 1), 128)
    fcw = jnp.pad(fc_w, ((0, 0), (0, c_pad - num_classes))).astype(jnp.bfloat16)
    fcb = jnp.pad(fc_b, (0, c_pad - num_classes)).reshape(1, c_pad).astype(jnp.float32)

    # --- generation-aware tile sizing -----------------------------------------
    vmem_cap = _vmem_capacity_bytes()            # 64 MiB on v7x, 128 MiB on v5e/v6e
    tile_budget = (vmem_cap * 3) // 8            # ~24 MiB on v7x, ~48 MiB otherwise
    resident = 2 * (k_pad * FEAT_C * 2 + FEAT_C * c_pad * 2) + 8 * (FEAT_C + c_pad)
    per_row = 2 * k_pad * 2 + 2 * FEAT_C * 4     # double-buffered A row + f32 epilogue temps
    tm_cap = max(8, min((tile_budget - resident) // per_row, 8192))
    tm = _pick_tm(HW, tm_cap)
    num_row_tiles = HW // tm

    cost = pl.CostEstimate(
        flops=2 * N * HW * k_pad * FEAT_C + 2 * N * FEAT_C * c_pad,
        transcendentals=0,
        bytes_accessed=(a.size * 2 + wmat.size * 2 + fcw.size * 2
                        + shift.size * 4 + fcb.size * 4 + N * c_pad * 4),
    )

    kernel = functools.partial(_fused_forward_kernel, inv_hw=1.0 / float(HW))

    # TODO(synk): when N == 1 on a 2-TensorCore chip (v7x) there is only one unit
    # of "parallel" work; a 2-way Cout split (with a tiny combine kernel) would be
    # needed to keep both cores busy.
    out = pl.pallas_call(
        kernel,
        out_shape=jax.ShapeDtypeStruct((N, 1, c_pad), jnp.float32),
        grid=(N, num_row_tiles),
        in_specs=[
            pl.BlockSpec((None, tm, k_pad), lambda n, t: (n, t, 0)),   # im2col row tile
            pl.BlockSpec((k_pad, FEAT_C), lambda n, t: (0, 0)),        # conv*BN weights (resident)
            pl.BlockSpec((1, FEAT_C), lambda n, t: (0, 0)),            # BN shift (resident)
            pl.BlockSpec((FEAT_C, c_pad), lambda n, t: (0, 0)),        # fc weights (resident)
            pl.BlockSpec((1, c_pad), lambda n, t: (0, 0)),             # fc bias (resident)
        ],
        out_specs=pl.BlockSpec((None, 1, c_pad), lambda n, t: (n, 0, 0)),
        scratch_shapes=[pltpu.VMEM((1, FEAT_C), jnp.float32)],
        compiler_params=pltpu.CompilerParams(
            dimension_semantics=("parallel", "arbitrary"),
            vmem_limit_bytes=int(min(vmem_cap * 3 // 4, 100 << 20))),
        cost_estimate=cost,
    )(a, wmat, shift, fcw, fcb)

    return out.reshape(N, c_pad)[:, :num_classes]


# ---------------------------------------------------------------------------
# Module: deterministic parameter construction + forward
# ---------------------------------------------------------------------------
class EfficientNetPallas:
    def __init__(self, in_channels, num_classes, key):
        k_conv, k_fc = jax.random.split(key, 2)

        # Conv2d(in_channels, 1280, 3, padding=1, bias=False); kaiming_normal fan_out
        fan_out = FEAT_C * 3 * 3
        std = math.sqrt(2.0 / fan_out)
        self.conv_w = std * jax.random.normal(
            k_conv, (FEAT_C, in_channels, 3, 3), dtype=jnp.float32)

        # BatchNorm2d(1280) eval mode: weight=1, bias=0, running_mean=0, running_var=1
        eps = 1e-5
        gamma = jnp.ones((FEAT_C,), jnp.float32)
        beta = jnp.zeros((FEAT_C,), jnp.float32)
        running_mean = jnp.zeros((FEAT_C,), jnp.float32)
        running_var = jnp.ones((FEAT_C,), jnp.float32)
        self.bn_scale = gamma / jnp.sqrt(running_var + eps)
        self.bn_shift = beta - running_mean * self.bn_scale

        # classifier = Dropout(0.2) + Linear(1280, num_classes).
        # _initialize_weights uses fan_out = weight.size(0) = num_classes.
        init_range = 1.0 / math.sqrt(num_classes)
        w = jax.random.uniform(
            k_fc, (num_classes, FEAT_C), dtype=jnp.float32,
            minval=-init_range, maxval=init_range)
        self.fc_w = jnp.transpose(w)            # (1280, num_classes) for x @ W.T
        self.fc_b = jnp.zeros((num_classes,), jnp.float32)

    def __call__(self, x_nchw):
        # TODO(synk): Dropout(0.2) is identity at inference; not implemented as a kernel.
        x = jnp.transpose(x_nchw, (0, 2, 3, 1)).astype(jnp.float32)   # NCHW -> NHWC
        return fused_conv_bn_relu_gap_fc(
            x, self.conv_w, self.bn_scale, self.bn_shift, self.fc_w, self.fc_b)


if __name__ == "__main__":
    key = jax.random.PRNGKey(0)
    k_params, k_input = jax.random.split(key)

    batch, in_channels, spatial, num_classes = 2, 4, 16, 10
    model = EfficientNetPallas(in_channels, num_classes, k_params)

    x = jax.random.normal(k_input, (batch, in_channels, spatial, spatial), jnp.float32)

    out = jax.jit(lambda inp: model(inp))(x)
    out = jax.block_until_ready(out)
    assert out.shape == (batch, num_classes)
    assert out.dtype == jnp.float32

    # Full-precision, unfused pure-JAX reference (original conv/BN/fc params) to
    # validate the fused kernel including the BN-scale folding and bf16 casts.
    xh = jnp.transpose(x, (0, 2, 3, 1))
    xp = jnp.pad(xh, ((0, 0), (1, 1), (1, 1), (0, 0)))
    pat = jnp.concatenate(
        [xp[:, dh:dh + spatial, dw:dw + spatial, :]
         for dh in range(3) for dw in range(3)], axis=-1
    ).reshape(batch, spatial * spatial, 9 * in_channels)
    wm = jnp.transpose(model.conv_w, (2, 3, 1, 0)).reshape(9 * in_channels, FEAT_C)
    y = jnp.einsum("bmk,kc->bmc", pat, wm)
    y = jnp.maximum(y * model.bn_scale + model.bn_shift, 0.0)
    pooled = y.mean(axis=1)
    ref = pooled @ model.fc_w + model.fc_b
    assert jnp.allclose(out, ref, rtol=2e-2, atol=2e-2), "mismatch vs pure-JAX reference"

    print("KERNEL_OK")
</pallas_src>

<mosaic_0001>
module attributes {stable_mosaic.version = 11 : i64} {
  func.func @_fused_forward_kernel(%arg0: i32, %arg1: i32, %arg2: memref<1x256x48xbf16, #tpu.memory_space<vmem>>, %arg3: memref<48x1280xbf16, #tpu.memory_space<vmem>>, %arg4: memref<1x1280xf32, #tpu.memory_space<vmem>>, %arg5: memref<1280x128xbf16, #tpu.memory_space<vmem>>, %arg6: memref<1x128xf32, #tpu.memory_space<vmem>>, %arg7: memref<1x1x128xf32, #tpu.memory_space<vmem>>, %arg8: memref<1x1280xf32, #tpu.memory_space<vmem>>) attributes {dimension_semantics = [#tpu.dimension_semantics<parallel>, #tpu.dimension_semantics<arbitrary>], iteration_bounds = array<i64: 2, 1>, scalar_prefetch = 0 : i64, scratch_operands = 1 : i64, tpu.core_type = #tpu.core_type<tc>, window_params = [{transform_indices = @transform_0, window_bounds = array<i64: 1, 256, 48>}, {pipeline_mode = #tpu.pipeline_mode<synchronous>, transform_indices = @transform_1, window_bounds = array<i64: 48, 1280>}, {pipeline_mode = #tpu.pipeline_mode<synchronous>, transform_indices = @transform_2, window_bounds = array<i64: 1, 1280>}, {pipeline_mode = #tpu.pipeline_mode<synchronous>, transform_indices = @transform_3, window_bounds = array<i64: 1280, 128>}, {pipeline_mode = #tpu.pipeline_mode<synchronous>, transform_indices = @transform_4, window_bounds = array<i64: 1, 128>}, {transform_indices = @transform_5, window_bounds = array<i64: 1, 1, 128>}]} {
    %c0_i32 = arith.constant 0 : i32
    %0 = arith.cmpi eq, %arg1, %c0_i32 : i32
    %1 = arith.extui %0 : i1 to i32
    %c0_i32_0 = arith.constant 0 : i32
    %2 = arith.cmpi ne, %1, %c0_i32_0 : i32
    scf.if %2 {
      %cst_15 = arith.constant 0.000000e+00 : f32
      %20 = vector.broadcast %cst_15 : f32 to vector<1x1280xf32>
      %c0_16 = arith.constant 0 : index
      %c0_17 = arith.constant 0 : index
      %21 = vector.load %arg8[%c0_16, %c0_17] : memref<1x1280xf32, #tpu.memory_space<vmem>>, vector<1x1280xf32>
      tpu.vector_store %arg8[%c0_16, %c0_17], %20 {strides = array<i32>} : memref<1x1280xf32, #tpu.memory_space<vmem>>, vector<1x1280xf32>,
    } else {
    }
    %c0 = arith.constant 0 : index
    %c0_1 = arith.constant 0 : index
    %c0_2 = arith.constant 0 : index
    %3 = vector.load %arg2[%c0, %c0_1, %c0_2] : memref<1x256x48xbf16, #tpu.memory_space<vmem>>, vector<1x256x48xbf16>
    %4 = vector.shape_cast %3 : vector<1x256x48xbf16> to vector<256x48xbf16>
    %c0_3 = arith.constant 0 : index
    %c0_4 = arith.constant 0 : index
    %5 = vector.load %arg3[%c0_3, %c0_4] : memref<48x1280xbf16, #tpu.memory_space<vmem>>, vector<48x1280xbf16>
    %cst = arith.constant dense<0.000000e+00> : vector<256x1280xf32>
    %6 = tpu.matmul %4, %5, %cst {dimension_numbers = #tpu.dot_dimension_numbers<[1], [0], [0], [1], [0, 0, 1, 1], [], []>} : vector<256x48xbf16>, vector<48x1280xbf16>, vector<256x1280xf32> -> vector<256x1280xf32>
    %c0_5 = arith.constant 0 : index
    %c0_6 = arith.constant 0 : index
    %7 = vector.load %arg4[%c0_5, %c0_6] : memref<1x1280xf32, #tpu.memory_space<vmem>>, vector<1x1280xf32>
    %8 = vector.broadcast %7 : vector<1x1280xf32> to vector<256x1280xf32>
    %9 = arith.addf %6, %8 : vector<256x1280xf32>
    %cst_7 = arith.constant 0.000000e+00 : f32
    %10 = vector.broadcast %cst_7 : f32 to vector<256x1280xf32>
    %11 = arith.maximumf %9, %10 : vector<256x1280xf32>
    %c0_8 = arith.constant 0 : index
    %c0_9 = arith.constant 0 : index
    %12 = vector.load %arg8[%c0_8, %c0_9] : memref<1x1280xf32, #tpu.memory_space<vmem>>, vector<1x1280xf32>
    %cst_10 = arith.constant dense<0.000000e+00> : vector<1280xf32>
    %13 = vector.multi_reduction <add>, %11, %cst_10 [0] : vector<256x1280xf32> to vector<1280xf32>
    %14 = vector.shape_cast %13 : vector<1280xf32> to vector<1x1280xf32>
    %15 = arith.addf %12, %14 : vector<1x1280xf32>
    %c0_11 = arith.constant 0 : index
    %c0_12 = arith.constant 0 : index
    %16 = vector.load %arg8[%c0_11, %c0_12] : memref<1x1280xf32, #tpu.memory_space<vmem>>, vector<1x1280xf32>
    tpu.vector_store %arg8[%c0_11, %c0_12], %15 {strides = array<i32>} : memref<1x1280xf32, #tpu.memory_space<vmem>>, vector<1x1280xf32>,
    %c0_i32_13 = arith.constant 0 : i32
    %17 = arith.cmpi eq, %arg1, %c0_i32_13 : i32
    %18 = arith.extui %17 : i1 to i32
    %c0_i32_14 = arith.constant 0 : i32
    %19 = arith.cmpi ne, %18, %c0_i32_14 : i32
    scf.if %19 {
      %c0_15 = arith.constant 0 : index
      %c0_16 = arith.constant 0 : index
      %20 = vector.load %arg8[%c0_15, %c0_16] : memref<1x1280xf32, #tpu.memory_space<vmem>>, vector<1x1280xf32>
      %cst_17 = arith.constant 3.906250e-03 : f32
      %21 = vector.broadcast %cst_17 : f32 to vector<1x1280xf32>
      %22 = arith.mulf %20, %21 : vector<1x1280xf32>
      %23 = arith.truncf %22 : vector<1x1280xf32> to vector<1x1280xbf16>
      %c0_18 = arith.constant 0 : index
      %c0_19 = arith.constant 0 : index
      %24 = vector.load %arg5[%c0_18, %c0_19] : memref<1280x128xbf16, #tpu.memory_space<vmem>>, vector<1280x128xbf16>
      %cst_20 = arith.constant dense<0.000000e+00> : vector<1x128xf32>
      %25 = tpu.matmul %23, %24, %cst_20 {dimension_numbers = #tpu.dot_dimension_numbers<[1], [0], [0], [1], [0, 0, 1, 1], [], []>} : vector<1x1280xbf16>, vector<1280x128xbf16>, vector<1x128xf32> -> vector<1x128xf32>
      %c0_21 = arith.constant 0 : index
      %c0_22 = arith.constant 0 : index
      %26 = vector.load %arg6[%c0_21, %c0_22] : memref<1x128xf32, #tpu.memory_space<vmem>>, vector<1x128xf32>
      %27 = arith.addf %25, %26 : vector<1x128xf32>
      %c0_23 = arith.constant 0 : index
      %c0_24 = arith.constant 0 : index
      %c0_25 = arith.constant 0 : index
      %28 = vector.load %arg7[%c0_23, %c0_24, %c0_25] : memref<1x1x128xf32, #tpu.memory_space<vmem>>, vector<1x1x128xf32>
      %29 = vector.shape_cast %28 : vector<1x1x128xf32> to vector<1x128xf32>
      %30 = vector.shape_cast %27 : vector<1x128xf32> to vector<1x1x128xf32>
      tpu.vector_store %arg7[%c0_23, %c0_24, %c0_25], %30 {strides = array<i32>} : memref<1x1x128xf32, #tpu.memory_space<vmem>>, vector<1x1x128xf32>,
    } else {
    }
    return
  }
  func.func @transform_0(%arg0: i32, %arg1: i32) -> (i32, i32, i32) {
    %c0_i32 = arith.constant 0 : i32
    %c0_i32_0 = arith.constant 0 : i32
    return %arg0, %arg1, %c0_i32 : i32, i32, i32
  }
  func.func @transform_1(%arg0: i32, %arg1: i32) -> (i32, i32) {
    %c0_i32 = arith.constant 0 : i32
    %c0_i32_0 = arith.constant 0 : i32
    %c0_i32_1 = arith.constant 0 : i32
    return %c0_i32, %c0_i32_0 : i32, i32
  }
  func.func @transform_2(%arg0: i32, %arg1: i32) -> (i32, i32) {
    %c0_i32 = arith.constant 0 : i32
    %c0_i32_0 = arith.constant 0 : i32
    %c0_i32_1 = arith.constant 0 : i32
    return %c0_i32, %c0_i32_0 : i32, i32
  }
  func.func @transform_3(%arg0: i32, %arg1: i32) -> (i32, i32) {
    %c0_i32 = arith.constant 0 : i32
    %c0_i32_0 = arith.constant 0 : i32
    %c0_i32_1 = arith.constant 0 : i32
    return %c0_i32, %c0_i32_0 : i32, i32
  }
  func.func @transform_4(%arg0: i32, %arg1: i32) -> (i32, i32) {
    %c0_i32 = arith.constant 0 : i32
    %c0_i32_0 = arith.constant 0 : i32
    %c0_i32_1 = arith.constant 0 : i32
    return %c0_i32, %c0_i32_0 : i32, i32
  }
  func.func @transform_5(%arg0: i32, %arg1: i32) -> (i32, i32, i32) {
    %c0_i32 = arith.constant 0 : i32
    %c0_i32_0 = arith.constant 0 : i32
    %c0_i32_1 = arith.constant 0 : i32
    return %arg0, %c0_i32, %c0_i32_0 : i32, i32, i32
  }
}

</mosaic_0001>

<llo_original>
// kernel: _lambda_.1
$region0: #{_lambda_.1}
  #allocation0 [shape = 'u32[]', space=smem, size = 0x4, offset = 0x4, fixed_abs, tag = 'smem constant byte address 0x4 - core index']
  #allocation1 [shape = 'u32[144,128]{1,0:T(1,128)}', space=vmem, size = 0x12000, scoped, tag = 'internal scratch']
  #allocation2 [shape = 'f32[1,1280]{1,0:T(1,128)}', space=vmem, size = 0x1400, scoped, tag = 'scratch operand']
  %s0 = inlined_call_operand.vmem [shape: bf16[2,256,48], index: 0, kind: input, shape index: {}]
  %s1 = inlined_call_operand.vmem [shape: bf16[48,1280], index: 1, kind: input, shape index: {}]
  %s2 = inlined_call_operand.vmem [shape: f32[1,1280], index: 2, kind: input, shape index: {}]
  %s3 = inlined_call_operand.vmem [shape: bf16[1280,128], index: 3, kind: input, shape index: {}]
  %s4 = inlined_call_operand.vmem [shape: f32[1,128], index: 4, kind: input, shape index: {}]
  %s5 = inlined_call_operand.hbm [shape: f32[2,1,128], index: 5, kind: output, shape index: {}]
  %s6 = sld [smem:[#allocation0]]
  $region61: #{_lambda_.1} parent=0
    _
  %s8 = ssub.s32 1, %s6
  %s9 = scalar_select 0, %s8, %s6
  $region1: #{_lambda_.1} parent=0
    #allocation3 [shape = 'u8[1024]{0}', space=vmem, size = 0x400, scoped, tag = 'output window, operand 0']
    #allocation4 [shape = 's32[2]{0}', space=sflag, size = 0x8, scoped, tag = 'scoped memory for _lambda_.1']
    %10 = vsyncpa [#allocation4], 0
    %s11 = scalar_lea.sflag [#allocation4], 1
    %12 = vsyncpa %s11, 0
    loop: start=0, step=1, limit=4
    $region2: #{_lambda_.1} parent=1 // loop_pre_header
      _
    $region3: #{_lambda_.1} parent=1 // loop_header
      %s14 = sphi 0, %s18
      %p15 = scmp.ge.s32.totalorder %s14, 4
      %s21 = sphi 0, %s33
      %s22 = sphi 0, %s29
      %s23 = sphi 0, %s21
      %s24 = sphi 0, %s22
      %s25 = sphi 0, %s23
      %s26 = sphi 0, %s24
      %s38 = sphi 0, %s40
      %s41 = sphi 0, %s38
      %s42 = sphi 0, %s41
      %s58 = sphi 0, %s42
      %s62 = sphi 0, %s62
      %s64 = sphi 0, %s62
      %s65 = sphi 0, %s64
      %s79 = sphi 0, %s65
      %s83 = sphi 0, %s83
      %s85 = sphi 0, %s83
      %s86 = sphi 0, %s85
      %s100 = sphi 0, %s86
      %s104 = sphi 0, %s104
      %s106 = sphi 0, %s104
      %s107 = sphi 0, %s106
      %s121 = sphi 0, %s107
      %s125 = sphi 0, %s125
      %s127 = sphi 0, %s125
      %s128 = sphi 0, %s127
      %s142 = sphi 0, %s128
      %s148 = sphi 0, %s150
      %s151 = sphi 0, %s148
      %s152 = sphi 0, %s151
      %s168 = sphi 0, %s152
    $region4: #{_lambda_.1} parent=1 // loop_header_branch
      %17 = sbr.rel (%p15) target = $region8
    $region5: #{_lambda_.1} parent=1 // loop_body
      %s19 = ssub.s32 %s14, 1
      %s20 = ssub.s32 %s14, 2
      %s27 = sadd.s32 1, %s22
      %p28 = scmp.ge.s32.totalorder %s27, 1
      %s29 = scalar_select %p28, 0, %s27
      %s30 = sadd.s32 1, %s21
      %s31 = scalar_select %p28, %s30, %s21
      %p32 = scmp.ge.s32.totalorder %s31, 2
      %s33 = scalar_select %p32, 0, %s31
      %s34 = ssub.s32 %s21, %s33
      %s35 = ssub.s32 %s22, %s29
      %s36 = sor.u32 %s34, %s35
      %p37 = scmp.eq.s32.totalorder %s36, 0
      %s39 = sadd.s32 %s38, 1
      %s40 = scalar_select %p37, %s38, %s39
      %p43 = pneg %p37
      %p44 = scmp.eq.s32.totalorder %s14, 1
      %p45 = por %p43, %p44
      %p46 = scmp.ne.s32.totalorder %s38, %s41
      %p47 = scmp.eq.s32.totalorder %s14, 0
      %p48 = por %p46, %p47
      %p49 = scmp.ne.s32.totalorder %s38, %s41
      %p50 = scmp.eq.s32.totalorder %s19, 1
      %p51 = por %p49, %p50
      %p52 = scmp.ne.s32.totalorder %s41, %s42
      %p53 = scmp.eq.s32.totalorder %s19, 0
      %p54 = por %p52, %p53
      %p55 = scmp.ne.s32.totalorder %s41, %s42
      %p56 = scmp.eq.s32.totalorder %s20, 1
      %p57 = por %p55, %p56
      %p59 = scmp.ne.s32.totalorder %s42, %s58
      %p60 = scmp.eq.s32.totalorder %s20, 0
      %p61 = por %p59, %p60
      %s63 = sadd.s32 %s62, 1
      %p66 = scmp.eq.s32.totalorder %s14, 1
      %p67 = scmp.ne.s32.totalorder %s62, %s64
      %p68 = scmp.eq.s32.totalorder %s14, 0
      %p69 = por %p67, %p68
      %p70 = scmp.ne.s32.totalorder %s62, %s64
      %p71 = scmp.eq.s32.totalorder %s19, 1
      %p72 = por %p70, %p71
      %p73 = scmp.ne.s32.totalorder %s64, %s65
      %p74 = scmp.eq.s32.totalorder %s19, 0
      %p75 = por %p73, %p74
      %p76 = scmp.ne.s32.totalorder %s64, %s65
      %p77 = scmp.eq.s32.totalorder %s20, 1
      %p78 = por %p76, %p77
      %p80 = scmp.ne.s32.totalorder %s65, %s79
      %p81 = scmp.eq.s32.totalorder %s20, 0
      %p82 = por %p80, %p81
      %s84 = sadd.s32 %s83, 1
      %p87 = scmp.eq.s32.totalorder %s14, 1
      %p88 = scmp.ne.s32.totalorder %s83, %s85
      %p89 = scmp.eq.s32.totalorder %s14, 0
      %p90 = por %p88, %p89
      %p91 = scmp.ne.s32.totalorder %s83, %s85
      %p92 = scmp.eq.s32.totalorder %s19, 1
      %p93 = por %p91, %p92
      %p94 = scmp.ne.s32.totalorder %s85, %s86
      %p95 = scmp.eq.s32.totalorder %s19, 0
      %p96 = por %p94, %p95
      %p97 = scmp.ne.s32.totalorder %s85, %s86
      %p98 = scmp.eq.s32.totalorder %s20, 1
      %p99 = por %p97, %p98
      %p101 = scmp.ne.s32.totalorder %s86, %s100
      %p102 = scmp.eq.s32.totalorder %s20, 0
      %p103 = por %p101, %p102
      %s105 = sadd.s32 %s104, 1
      %p108 = scmp.eq.s32.totalorder %s14, 1
      %p109 = scmp.ne.s32.totalorder %s104, %s106
      %p110 = scmp.eq.s32.totalorder %s14, 0
      %p111 = por %p109, %p110
      %p112 = scmp.ne.s32.totalorder %s104, %s106
      %p113 = scmp.eq.s32.totalorder %s19, 1
      %p114 = por %p112, %p113
      %p115 = scmp.ne.s32.totalorder %s106, %s107
      %p116 = scmp.eq.s32.totalorder %s19, 0
      %p117 = por %p115, %p116
      %p118 = scmp.ne.s32.totalorder %s106, %s107
      %p119 = scmp.eq.s32.totalorder %s20, 1
      %p120 = por %p118, %p119
      %p122 = scmp.ne.s32.totalorder %s107, %s121
      %p123 = scmp.eq.s32.totalorder %s20, 0
      %p124 = por %p122, %p123
      %s126 = sadd.s32 %s125, 1
      %p129 = scmp.eq.s32.totalorder %s14, 1
      %p130 = scmp.ne.s32.totalorder %s125, %s127
      %p131 = scmp.eq.s32.totalorder %s14, 0
      %p132 = por %p130, %p131
      %p133 = scmp.ne.s32.totalorder %s125, %s127
      %p134 = scmp.eq.s32.totalorder %s19, 1
      %p135 = por %p133, %p134
      %p136 = scmp.ne.s32.totalorder %s127, %s128
      %p137 = scmp.eq.s32.totalorder %s19, 0
      %p138 = por %p136, %p137
      %p139 = scmp.ne.s32.totalorder %s127, %s128
      %p140 = scmp.eq.s32.totalorder %s20, 1
      %p141 = por %p139, %p140
      %p143 = scmp.ne.s32.totalorder %s128, %s142
      %p144 = scmp.eq.s32.totalorder %s20, 0
      %p145 = por %p143, %p144
      %s146 = ssub.s32 %s21, %s33
      %p147 = scmp.eq.s32.totalorder %s146, 0
      %s149 = sadd.s32 %s148, 1
      %s150 = scalar_select %p147, %s148, %s149
      %p153 = pneg %p147
      %p154 = scmp.eq.s32.totalorder %s14, 1
      %p155 = por %p153, %p154
      %p156 = scmp.ne.s32.totalorder %s148, %s151
      %p157 = scmp.eq.s32.totalorder %s14, 0
      %p158 = por %p156, %p157
      %p159 = scmp.ne.s32.totalorder %s148, %s151
      %p160 = scmp.eq.s32.totalorder %s19, 1
      %p161 = por %p159, %p160
      %p162 = scmp.ne.s32.totalorder %s151, %s152
      %p163 = scmp.eq.s32.totalorder %s19, 0
      %p164 = por %p162, %p163
      %p165 = scmp.ne.s32.totalorder %s151, %s152
      %p166 = scmp.eq.s32.totalorder %s20, 1
      %p167 = por %p165, %p166
      %p169 = scmp.ne.s32.totalorder %s152, %s168
      %p170 = scmp.eq.s32.totalorder %s20, 0
      %p171 = por %p169, %p170
      %p172 = scmp.le.s32.totalorder 1, %s14
      %p173 = scmp.lt.s32.totalorder %s14, 3
      %p174 = pnand %p172, %p173
      %p175 = pneg %p174
      // Predicated region
      $region9: #{_lambda_.1} parent=5 // pred_check
        _
      $region10: #{_lambda_.1} parent=5 // pred_check_branch
        %177 = sbr.rel (%p174) target = $region12
      $region11: #{_lambda_.1} parent=5 // pred_region
        %s178 = ssub.s32 %s14, 1
        // Predicated region
        $region13: #{_lambda_.1} parent=11 // pred_check
          %p179 = pneg %p75
        $region14: #{_lambda_.1} parent=11 // pred_check_branch
          %181 = sbr.rel (%p179) target = $region16
        $region15: #{_lambda_.1} parent=11 // pred_region
          _
        $region16: #{_lambda_.1} parent=11 // pred_fallthru
          _
        // Predicated region
        $region17: #{_lambda_.1} parent=11 // pred_check
          %p182 = pneg %p96
        $region18: #{_lambda_.1} parent=11 // pred_check_branch
          %184 = sbr.rel (%p182) target = $region20
        $region19: #{_lambda_.1} parent=11 // pred_region
          _
        $region20: #{_lambda_.1} parent=11 // pred_fallthru
          _
        // Predicated region
        $region21: #{_lambda_.1} parent=11 // pred_check
          %p185 = pneg %p117
        $region22: #{_lambda_.1} parent=11 // pred_check_branch
          %187 = sbr.rel (%p185) target = $region24
        $region23: #{_lambda_.1} parent=11 // pred_region
          _
        $region24: #{_lambda_.1} parent=11 // pred_fallthru
          _
        // Predicated region
        $region25: #{_lambda_.1} parent=11 // pred_check
          %p188 = pneg %p138
        $region26: #{_lambda_.1} parent=11 // pred_check_branch
          %190 = sbr.rel (%p188) target = $region28
        $region27: #{_lambda_.1} parent=11 // pred_region
          _
        $region28: #{_lambda_.1} parent=11 // pred_fallthru
          _
      $region12: #{_lambda_.1} parent=5 // pred_fallthru
        _
      %p191 = scmp.lt.s32.totalorder %s14, 2
      // Predicated region
      $region29: #{_lambda_.1} parent=5 // pred_check
        %p192 = pneg %p191
      $region30: #{_lambda_.1} parent=5 // pred_check_branch
        %194 = sbr.rel (%p192) target = $region32
      $region31: #{_lambda_.1} parent=5 // pred_region
        // Predicated region
        $region33: #{_lambda_.1} parent=31 // pred_check
          %p195 = pneg %p48
        $region34: #{_lambda_.1} parent=31 // pred_check_branch
          %197 = sbr.rel (%p195) target = $region36
        $region35: #{_lambda_.1} parent=31 // pred_region
          %s198 = smul.u32 32, %s22
          %p199 = scmp.lt.s32.totalorder %s21, 1
          %s200 = scalar_select %p199, %s21, 1
          %p201 = scmp.lt.s32.totalorder %s198, 31
          %s202 = scalar_select %p201, %s198, 31
          %s203 = smul.addr %s200, 32
          %s204 = sadd.s32 %s202, %s203
          %s205 = smul.addr %s204, 4
          %s206 = scalar_lea.vmem %s0, %s205
          %s207 = smul.u32 32, %s22
        $region36: #{_lambda_.1} parent=31 // pred_fallthru
          _
      $region32: #{_lambda_.1} parent=5 // pred_fallthru
        _
      %p208 = scmp.le.s32.totalorder 1, %s14
      %p209 = scmp.lt.s32.totalorder %s14, 3
      %p210 = pnand %p208, %p209
      %p211 = pneg %p210
      // Predicated region
      $region37: #{_lambda_.1} parent=5 // pred_check
        _
      $region38: #{_lambda_.1} parent=5 // pred_check_branch
        %213 = sbr.rel (%p210) target = $region40
      $region39: #{_lambda_.1} parent=5 // pred_region
        %s214 = ssub.s32 %s14, 1
        %s215 = smul.u32 32, %s24
        %p216 = scmp.lt.s32.totalorder %s23, 1
        %s217 = scalar_select %p216, %s23, 1
        %p218 = scmp.lt.s32.totalorder %s215, 31
        %s219 = scalar_select %p218, %s215, 31
        %s220 = smul.addr %s217, 32
        %s221 = sadd.s32 %s219, %s220
        %s222 = smul.addr %s221, 4
        %s223 = scalar_lea.vmem %s0, %s222
        %p224 = pneg %p54
        %p225 = pneg %p51
        %p226 = pneg %p75
        %p227 = pneg %p72
        %p228 = pneg %p96
        %p229 = pneg %p93
        %p230 = pneg %p117
        %p231 = pneg %p114
        %p232 = pneg %p138
        %p233 = pneg %p135
        %p234 = pneg %p164
        %p235 = pneg %p161
        %s236 = sand.u32 %s151, 1
        %s237 = scalar_lea.sflag [#allocation4], %s236
        %s238 = sand.u32 %s151, 1
        %s239 = scalar_lea.vmem [#allocation3], %s238
        %s240 = smul.u32 32, %s24
        %p241 = scmp.lt.s32.totalorder %s23, 1
        %s242 = scalar_select %p241, %s23, 1
        %p243 = scmp.lt.s32.totalorder %s240, 31
        %s244 = scalar_select %p243, %s240, 31
        %s245 = smul.addr %s242, 32
        %s246 = sadd.s32 %s244, %s245
        %s247 = smul.addr %s246, 4
        %s248 = scalar_lea.vmem %s0, %s247
        %s249 = smul.u32 32, %s24
        %p251 = scmp.eq.s32.totalorder %s24, 0
        // Predicated region
        $region41: #{_lambda_.1} parent=39 // pred_check
          %p252 = pneg %p251
        $region42: #{_lambda_.1} parent=39 // pred_check_branch
          %254 = sbr.rel (%p252) target = $region44
        $region43: #{_lambda_.1} parent=39 // pred_region
          %255 = vst [vmem:[#allocation2] sm:$0xff] 0.0
          %v256 = vlaneseq
          %vm257 = vcmp.ge.s32.totalorder %v256, 0
          %vm258 = vcmp.lt.s32.totalorder %v256, 256
          %vm259 = vmand %vm257, %vm258
          %260 = vst.msk [vmem:[#allocation2 + $0x8] sm:$0x3] %vm259, 0.0
        $region44: #{_lambda_.1} parent=39 // pred_fallthru
          _
        %v261 = vld [vmem:[%s248] sm:$0xf]
        %v262 = vld [vmem:[%s248 + $0x4] sm:$0xf]
        %v263 = vld [vmem:[%s248 + $0x8] sm:$0xf]
        %v264 = vld [vmem:[%s248 + $0xc] sm:$0xf]
        %v265 = vld [vmem:[%s248 + $0x10] sm:$0xf]
        %v266 = vld [vmem:[%s248 + $0x14] sm:$0xf]
        %v267 = vld [vmem:[%s248 + $0x18] sm:$0xf]
        %v268 = vld [vmem:[%s248 + $0x1c] sm:$0xf]
        %v269 = vld [vmem:[%s248 + $0x20] sm:$0xf]
        %v270 = vld [vmem:[%s248 + $0x24] sm:$0xf]
        %v271 = vld [vmem:[%s248 + $0x28] sm:$0xf]
        %v272 = vld [vmem:[%s248 + $0x2c] sm:$0xf]
        %v273 = vld [vmem:[%s248 + $0x30] sm:$0xf]
        %v274 = vld [vmem:[%s248 + $0x34] sm:$0xf]
        %v275 = vld [vmem:[%s248 + $0x38] sm:$0xf]
        %v276 = vld [vmem:[%s248 + $0x3c] sm:$0xf]
        %v277 = vld [vmem:[%s248 + $0x40] sm:$0xf]
        %v278 = vld [vmem:[%s248 + $0x44] sm:$0xf]
        %v279 = vld [vmem:[%s248 + $0x48] sm:$0xf]
        %v280 = vld [vmem:[%s248 + $0x4c] sm:$0xf]
        %v281 = vld [vmem:[%s248 + $0x50] sm:$0xf]
        %v282 = vld [vmem:[%s248 + $0x54] sm:$0xf]
        %v283 = vld [vmem:[%s248 + $0x58] sm:$0xf]
        %v284 = vld [vmem:[%s248 + $0x5c] sm:$0xf]
        %v285 = vld [vmem:[%s248 + $0x60] sm:$0xf]
        %v286 = vld [vmem:[%s248 + $0x64] sm:$0xf]
        %v287 = vld [vmem:[%s248 + $0x68] sm:$0xf]
        %v288 = vld [vmem:[%s248 + $0x6c] sm:$0xf]
        %v289 = vld [vmem:[%s248 + $0x70] sm:$0xf]
        %v290 = vld [vmem:[%s248 + $0x74] sm:$0xf]
        %v291 = vld [vmem:[%s248 + $0x78] sm:$0xf]
        %v292 = vld [vmem:[%s248 + $0x7c] sm:$0xf]
        %v293 = vld [vmem:[%s1] sm:$0xff]
        %v294 = vld [vmem:[%s1 + $0x8] sm:$0xff]
        %v295 = vld [vmem:[%s1 + $0x10] sm:$0xff]
        %v296 = vld [vmem:[%s1 + $0x18] sm:$0xff]
        %v297 = vld [vmem:[%s1 + $0x20] sm:$0xff]
        %v298 = vld [vmem:[%s1 + $0x28] sm:$0xff]
        %v299 = vld [vmem:[%s1 + $0x30] sm:$0xff]
        %v300 = vld [vmem:[%s1 + $0x38] sm:$0xff]
        %v301 = vld [vmem:[%s1 + $0x40] sm:$0xff]
        %v302 = vld [vmem:[%s1 + $0x48] sm:$0xff]
        %v303 = vld [vmem:[%s1 + $0x50] sm:$0xff]
        %v304 = vld [vmem:[%s1 + $0x58] sm:$0xff]
        %v305 = vld [vmem:[%s1 + $0x60] sm:$0xff]
        %v306 = vld [vmem:[%s1 + $0x68] sm:$0xff]
        %v307 = vld [vmem:[%s1 + $0x70] sm:$0xff]
        %v308 = vld [vmem:[%s1 + $0x78] sm:$0xff]
        %v309 = vld [vmem:[%s1 + $0x80] sm:$0xff]
        %v310 = vld [vmem:[%s1 + $0x88] sm:$0xff]
        %v311 = vld [vmem:[%s1 + $0x90] sm:$0xff]
        %v312 = vld [vmem:[%s1 + $0x98] sm:$0xff]
        %v313 = vld [vmem:[%s1 + $0xa0] sm:$0xff]
        %v314 = vld [vmem:[%s1 + $0xa8] sm:$0xff]
        %v315 = vld [vmem:[%s1 + $0xb0] sm:$0xff]
        %v316 = vld [vmem:[%s1 + $0xb8] sm:$0xff]
        %v317 = vld [vmem:[%s1 + $0xc0] sm:$0xff]
        %v318 = vld [vmem:[%s1 + $0xc8] sm:$0xff]
        %v319 = vld [vmem:[%s1 + $0xd0] sm:$0xff]
        %v320 = vld [vmem:[%s1 + $0xd8] sm:$0xff]
        %v321 = vld [vmem:[%s1 + $0xe0] sm:$0xff]
        %v322 = vld [vmem:[%s1 + $0xe8] sm:$0xff]
        %v323 = vld [vmem:[%s2] sm:$0xff]
        %v324 = vld [vmem:[%s2 + $0x8] sm:$0x3]
        %v327 = vlaneseq
        %v328 = vshrl.u32 %v327, 7
        %v329 = vsub.s32 0, %v328
        %v330 = vrot.slane %v323, %v329
        %v331 = vlaneseq
        %v332 = vshrl.u32 %v331, 7
        %v333 = vsub.s32 1, %v332
        %v334 = vrot.slane %v323, %v333
        %v335 = vlaneseq
        %v336 = vshrl.u32 %v335, 7
        %v337 = vsub.s32 2, %v336
        %v338 = vrot.slane %v323, %v337
        %v339 = vlaneseq
        %v340 = vshrl.u32 %v339, 7
        %v341 = vsub.s32 3, %v340
        %v342 = vrot.slane %v323, %v341
        %v343 = vlaneseq
        %v344 = vshrl.u32 %v343, 7
        %v345 = vsub.s32 4, %v344
        %v346 = vrot.slane %v323, %v345
        %v347 = vlaneseq
        %v348 = vshrl.u32 %v347, 7
        %v349 = vsub.s32 5, %v348
        %v350 = vrot.slane %v323, %v349
        %v351 = vlaneseq
        %v352 = vshrl.u32 %v351, 7
        %v353 = vsub.s32 6, %v352
        %v354 = vrot.slane %v323, %v353
        %v355 = vlaneseq
        %v356 = vshrl.u32 %v355, 7
        %v357 = vsub.s32 7, %v356
        %v358 = vrot.slane %v323, %v357
        %v359 = vlaneseq
        %v360 = vshrl.u32 %v359, 7
        %v361 = vsub.s32 0, %v360
        %v362 = vrot.slane %v324, %v361
        %v363 = vlaneseq
        %v364 = vshrl.u32 %v363, 7
        %v365 = vsub.s32 1, %v364
        %v366 = vrot.slane %v324, %v365
        %v409 = vunpack.c.l.b16 %v261
        %v410 = vunpack.c.l.b16 %v262
        %v411 = vunpack.c.l.b16 %v263
        %v412 = vunpack.c.l.b16 %v264
        %v413 = vunpack.c.l.b16 %v265
        %v414 = vunpack.c.l.b16 %v266
        %v415 = vunpack.c.l.b16 %v267
        %v416 = vunpack.c.l.b16 %v268
        %v417 = vunpack.c.l.b16 %v269
        %v418 = vunpack.c.l.b16 %v270
        %v419 = vunpack.c.l.b16 %v271
        %v420 = vunpack.c.l.b16 %v272
        %v421 = vunpack.c.l.b16 %v273
        %v422 = vunpack.c.l.b16 %v274
        %v423 = vunpack.c.l.b16 %v275
        %v424 = vunpack.c.l.b16 %v276
        %v425 = vunpack.c.l.b16 %v277
        %v426 = vunpack.c.l.b16 %v278
        %v427 = vunpack.c.l.b16 %v279
        %v428 = vunpack.c.l.b16 %v280
        %v429 = vunpack.c.l.b16 %v281
        %v430 = vunpack.c.l.b16 %v282
        %v431 = vunpack.c.l.b16 %v283
        %v432 = vunpack.c.l.b16 %v284
        %v433 = vunpack.c.l.b16 %v285
        %v434 = vunpack.c.l.b16 %v286
        %v435 = vunpack.c.l.b16 %v287
        %v436 = vunpack.c.l.b16 %v288
        %v437 = vunpack.c.l.b16 %v289
        %v438 = vunpack.c.l.b16 %v290
        %v439 = vunpack.c.l.b16 %v291
        %v440 = vunpack.c.l.b16 %v292
        %v441 = vpack.c.b16 %v410, %v409
        %v442 = vpack.c.b16 %v412, %v411
        %v443 = vpack.c.b16 %v414, %v413
        %v444 = vpack.c.b16 %v416, %v415
        %v445 = vpack.c.b16 %v418, %v417
        %v446 = vpack.c.b16 %v420, %v419
        %v447 = vpack.c.b16 %v422, %v421
        %v448 = vpack.c.b16 %v424, %v423
        %v449 = vpack.c.b16 %v426, %v425
        %v450 = vpack.c.b16 %v428, %v427
        %v451 = vpack.c.b16 %v430, %v429
        %v452 = vpack.c.b16 %v432, %v431
        %v453 = vpack.c.b16 %v434, %v433
        %v454 = vpack.c.b16 %v436, %v435
        %v455 = vpack.c.b16 %v438, %v437
        %v456 = vpack.c.b16 %v440, %v439
        %v487 = vunpack.c.l.b16 %v293
        %v488 = vunpack.c.h.b16 %v293
        %v489 = vunpack.c.l.b16 %v294
        %v490 = vunpack.c.h.b16 %v294
        %v491 = vunpack.c.l.b16 %v295
        %v492 = vunpack.c.h.b16 %v295
        %v493 = vunpack.c.l.b16 %v296
        %v494 = vunpack.c.h.b16 %v296
        %v495 = vunpack.c.l.b16 %v297
        %v496 = vunpack.c.h.b16 %v297
        %v497 = vunpack.c.l.b16 %v298
        %v498 = vunpack.c.h.b16 %v298
        %v499 = vunpack.c.l.b16 %v299
        %v500 = vunpack.c.h.b16 %v299
        %v501 = vunpack.c.l.b16 %v300
        %v502 = vunpack.c.h.b16 %v300
        %v503 = vunpack.c.l.b16 %v301
        %v504 = vunpack.c.h.b16 %v301
        %v505 = vunpack.c.l.b16 %v302
        %v506 = vunpack.c.h.b16 %v302
        %v507 = vunpack.c.l.b16 %v303
        %v508 = vunpack.c.h.b16 %v303
        %v509 = vunpack.c.l.b16 %v304
        %v510 = vunpack.c.h.b16 %v304
        %v511 = vunpack.c.l.b16 %v305
        %v512 = vunpack.c.h.b16 %v305
        %v513 = vunpack.c.l.b16 %v306
        %v514 = vunpack.c.h.b16 %v306
        %v515 = vunpack.c.l.b16 %v307
        %v516 = vunpack.c.h.b16 %v307
        %v517 = vunpack.c.l.b16 %v308
        %v518 = vunpack.c.h.b16 %v308
        %v519 = vunpack.c.l.b16 %v309
        %v520 = vunpack.c.h.b16 %v309
        %v521 = vunpack.c.l.b16 %v310
        %v522 = vunpack.c.h.b16 %v310
        %v523 = vunpack.c.l.b16 %v311
        %v524 = vunpack.c.h.b16 %v311
        %v525 = vunpack.c.l.b16 %v312
        %v526 = vunpack.c.h.b16 %v312
        %v527 = vunpack.c.l.b16 %v313
        %v528 = vunpack.c.h.b16 %v313
        %v529 = vunpack.c.l.b16 %v314
        %v530 = vunpack.c.h.b16 %v314
        %v531 = vunpack.c.l.b16 %v315
        %v532 = vunpack.c.h.b16 %v315
        %v533 = vunpack.c.l.b16 %v316
        %v534 = vunpack.c.h.b16 %v316
        %v535 = vunpack.c.l.b16 %v317
        %v536 = vunpack.c.h.b16 %v317
        %v537 = vunpack.c.l.b16 %v318
        %v538 = vunpack.c.h.b16 %v318
        %v539 = vunpack.c.l.b16 %v319
        %v540 = vunpack.c.h.b16 %v319
        %v541 = vunpack.c.l.b16 %v320
        %v542 = vunpack.c.h.b16 %v320
        %v543 = vunpack.c.l.b16 %v321
        %v544 = vunpack.c.h.b16 %v321
        %v545 = vunpack.c.l.b16 %v322
        %v546 = vunpack.c.h.b16 %v322
        %v547 = vpack.c.b16 %v497, %v487
        %v548 = vpack.c.b16 %v498, %v488
        %v549 = vpack.c.b16 %v499, %v489
        %v550 = vpack.c.b16 %v500, %v490
        %v551 = vpack.c.b16 %v501, %v491
        %v552 = vpack.c.b16 %v502, %v492
        %v553 = vpack.c.b16 %v503, %v493
        %v554 = vpack.c.b16 %v504, %v494
        %v555 = vpack.c.b16 %v505, %v495
        %v556 = vpack.c.b16 %v506, %v496
        %v557 = vpack.c.b16 %v517, %v507
        %v558 = vpack.c.b16 %v518, %v508
        %v559 = vpack.c.b16 %v519, %v509
        %v560 = vpack.c.b16 %v520, %v510
        %v561 = vpack.c.b16 %v521, %v511
        %v562 = vpack.c.b16 %v522, %v512
        %v563 = vpack.c.b16 %v523, %v513
        %v564 = vpack.c.b16 %v524, %v514
        %v565 = vpack.c.b16 %v525, %v515
        %v566 = vpack.c.b16 %v526, %v516
        %v567 = vpack.c.b16 %v537, %v527
        %v568 = vpack.c.b16 %v538, %v528
        %v569 = vpack.c.b16 %v539, %v529
        %v570 = vpack.c.b16 %v540, %v530
        %v571 = vpack.c.b16 %v541, %v531
        %v572 = vpack.c.b16 %v542, %v532
        %v573 = vpack.c.b16 %v543, %v533
        %v574 = vpack.c.b16 %v544, %v534
        %v575 = vpack.c.b16 %v545, %v535
        %v576 = vpack.c.b16 %v546, %v536
        %vm607 = vcmask 392192
        %v609 = vsel %vm607, %v441, 0
        %v612 = vsel %vm607, %v442, 0
        %v615 = vsel %vm607, %v443, 0
        %v618 = vsel %vm607, %v444, 0
        %v621 = vsel %vm607, %v445, 0
        %v624 = vsel %vm607, %v446, 0
        %v627 = vsel %vm607, %v447, 0
        %v630 = vsel %vm607, %v448, 0
        %v633 = vsel %vm607, %v449, 0
        %v636 = vsel %vm607, %v450, 0
        %v639 = vsel %vm607, %v451, 0
        %v642 = vsel %vm607, %v452, 0
        %v645 = vsel %vm607, %v453, 0
        %v648 = vsel %vm607, %v454, 0
        %v651 = vsel %vm607, %v455, 0
        %v654 = vsel %vm607, %v456, 0
        %656 = vmatprep.subr.bf16.mxu0 %v548
        %657 = vmatpush1.bf16.msra.mxu0 %v547
        %658 = vmatprep.subr.bf16.mxu0 %v558
        %659 = vmatpush1.bf16.msra.mxu0 %v557
        %660 = vmatprep.subr.bf16.mxu0 %v568
        %661 = vmatpush1.bf16.msra.mxu0 %v567
        %662 = vmatprep.subr.bf16.mxu0 0
        %663 = vmatpush1.bf16.msra.mxu0 0
        %664 = vmatprep.subr.bf16.mxu0 0
        %665 = vmatpush1.bf16.msra.mxu0 0
        %666 = vmatprep.subr.bf16.mxu0 0
        %667 = vmatpush1.bf16.msra.mxu0 0
        %668 = vmatprep.subr.bf16.mxu0 0
        %669 = vmatpush1.bf16.msra.mxu0 0
        %670 = vmatprep.subr.bf16.mxu0 0
        %671 = vmatpush1.bf16.msra.mxu0 0
        %672 = vmatprep.subr.bf16.mxu0 0
        %673 = vmatpush1.bf16.msra.mxu0 0
        %674 = vmatprep.subr.bf16.mxu0 0
        %675 = vmatpush1.bf16.msra.mxu0 0
        %676 = vmatprep.subr.bf16.mxu0 0
        %677 = vmatpush1.bf16.msra.mxu0 0
        %678 = vmatprep.subr.bf16.mxu0 0
        %679 = vmatpush1.bf16.msra.mxu0 0
        %680 = vmatprep.subr.bf16.mxu0 0
        %681 = vmatpush1.bf16.msra.mxu0 0
        %682 = vmatprep.subr.bf16.mxu0 0
        %683 = vmatpush1.bf16.msra.mxu0 0
        %684 = vmatprep.subr.bf16.mxu0 0
        %685 = vmatpush1.bf16.msra.mxu0 0
        %686 = vmatprep.subr.bf16.mxu0 0
        %687 = vmatpush1.bf16.msra.mxu0 0
        %688 = vmatprep.mubr.bf16.mxu0 0
        %689 = vmatmul.mubr.bf16.gmra.mrb[0].mxu0 %v609
        %v690 = vpop.f32.mrb[0].mxu0
        %v691 = vadd.f32 %v330, %v690
        %v692 = vpop.f32.mrb[0].mxu0
        %v693 = vadd.f32 %v334, %v692
        %v694 = vpop.f32.mrb[0].mxu0
        %v695 = vadd.f32 %v330, %v694
        %v696 = vpop.f32.mrb[0].mxu0
        %v697 = vadd.f32 %v334, %v696
        %698 = vmatprep.mubr.bf16.mxu0 0
        %699 = vmatmul.mubr.bf16.gmra.mrb[0].mxu0 %v612
        %v700 = vpop.f32.mrb[0].mxu0
        %v701 = vadd.f32 %v330, %v700
        %v702 = vpop.f32.mrb[0].mxu0
        %v703 = vadd.f32 %v334, %v702
        %v704 = vpop.f32.mrb[0].mxu0
        %v705 = vadd.f32 %v330, %v704
        %v706 = vpop.f32.mrb[0].mxu0
        %v707 = vadd.f32 %v334, %v706
        %708 = vmatprep.mubr.bf16.mxu0 0
        %709 = vmatmul.mubr.bf16.gmra.mrb[0].mxu0 %v615
        %v710 = vpop.f32.mrb[0].mxu0
        %v711 = vadd.f32 %v330, %v710
        %v712 = vpop.f32.mrb[0].mxu0
        %v713 = vadd.f32 %v334, %v712
        %v714 = vpop.f32.mrb[0].mxu0
        %v715 = vadd.f32 %v330, %v714
        %v716 = vpop.f32.mrb[0].mxu0
        %v717 = vadd.f32 %v334, %v716
        %718 = vmatprep.mubr.bf16.mxu0 0
        %719 = vmatmul.mubr.bf16.gmra.mrb[0].mxu0 %v618
        %v720 = vpop.f32.mrb[0].mxu0
        %v721 = vadd.f32 %v330, %v720
        %v722 = vpop.f32.mrb[0].mxu0
        %v723 = vadd.f32 %v334, %v722
        %v724 = vpop.f32.mrb[0].mxu0
        %v725 = vadd.f32 %v330, %v724
        %v726 = vpop.f32.mrb[0].mxu0
        %v727 = vadd.f32 %v334, %v726
        %728 = vmatprep.mubr.bf16.mxu0 0
        %729 = vmatmul.mubr.bf16.gmra.mrb[0].mxu0 %v621
        %v730 = vpop.f32.mrb[0].mxu0
        %v731 = vadd.f32 %v330, %v730
        %v732 = vpop.f32.mrb[0].mxu0
        %v733 = vadd.f32 %v334, %v732
        %v734 = vpop.f32.mrb[0].mxu0
        %v735 = vadd.f32 %v330, %v734
        %v736 = vpop.f32.mrb[0].mxu0
        %v737 = vadd.f32 %v334, %v736
        %738 = vmatprep.mubr.bf16.mxu0 0
        %739 = vmatmul.mubr.bf16.gmra.mrb[0].mxu0 %v624
        %v740 = vpop.f32.mrb[0].mxu0
        %v741 = vadd.f32 %v330, %v740
        %v742 = vpop.f32.mrb[0].mxu0
        %v743 = vadd.f32 %v334, %v742
        %v744 = vpop.f32.mrb[0].mxu0
        %v745 = vadd.f32 %v330, %v744
        %v746 = vpop.f32.mrb[0].mxu0
        %v747 = vadd.f32 %v334, %v746
        %748 = vmatprep.mubr.bf16.mxu0 0
        %749 = vmatmul.mubr.bf16.gmra.mrb[0].mxu0 %v627
        %v750 = vpop.f32.mrb[0].mxu0
        %v751 = vadd.f32 %v330, %v750
        %v752 = vpop.f32.mrb[0].mxu0
        %v753 = vadd.f32 %v334, %v752
        %v754 = vpop.f32.mrb[0].mxu0
        %v755 = vadd.f32 %v330, %v754
        %v756 = vpop.f32.mrb[0].mxu0
        %v757 = vadd.f32 %v334, %v756
        %758 = vmatprep.mubr.bf16.mxu0 0
        %759 = vmatmul.mubr.bf16.gmra.mrb[0].mxu0 %v630
        %v760 = vpop.f32.mrb[0].mxu0
        %v761 = vadd.f32 %v330, %v760
        %v762 = vpop.f32.mrb[0].mxu0
        %v763 = vadd.f32 %v334, %v762
        %v764 = vpop.f32.mrb[0].mxu0
        %v765 = vadd.f32 %v330, %v764
        %v766 = vpop.f32.mrb[0].mxu0
        %v767 = vadd.f32 %v334, %v766
        %768 = vmatprep.mubr.bf16.mxu0 0
        %769 = vmatmul.mubr.bf16.gmra.mrb[0].mxu0 %v633
        %v770 = vpop.f32.mrb[0].mxu0
        %v771 = vadd.f32 %v330, %v770
        %v772 = vpop.f32.mrb[0].mxu0
        %v773 = vadd.f32 %v334, %v772
        %v774 = vpop.f32.mrb[0].mxu0
        %v775 = vadd.f32 %v330, %v774
        %v776 = vpop.f32.mrb[0].mxu0
        %v777 = vadd.f32 %v334, %v776
        %778 = vmatprep.mubr.bf16.mxu0 0
        %779 = vmatmul.mubr.bf16.gmra.mrb[0].mxu0 %v636
        %v780 = vpop.f32.mrb[0].mxu0
        %v781 = vadd.f32 %v330, %v780
        %v782 = vpop.f32.mrb[0].mxu0
        %v783 = vadd.f32 %v334, %v782
        %v784 = vpop.f32.mrb[0].mxu0
        %v785 = vadd.f32 %v330, %v784
        %v786 = vpop.f32.mrb[0].mxu0
        %v787 = vadd.f32 %v334, %v786
        %788 = vmatprep.mubr.bf16.mxu0 0
        %789 = vmatmul.mubr.bf16.gmra.mrb[0].mxu0 %v639
        %v790 = vpop.f32.mrb[0].mxu0
        %v791 = vadd.f32 %v330, %v790
        %v792 = vpop.f32.mrb[0].mxu0
        %v793 = vadd.f32 %v334, %v792
        %v794 = vpop.f32.mrb[0].mxu0
        %v795 = vadd.f32 %v330, %v794
        %v796 = vpop.f32.mrb[0].mxu0
        %v797 = vadd.f32 %v334, %v796
        %798 = vmatprep.mubr.bf16.mxu0 0
        %799 = vmatmul.mubr.bf16.gmra.mrb[0].mxu0 %v642
        %v800 = vpop.f32.mrb[0].mxu0
        %v801 = vadd.f32 %v330, %v800
        %v802 = vpop.f32.mrb[0].mxu0
        %v803 = vadd.f32 %v334, %v802
        %v804 = vpop.f32.mrb[0].mxu0
        %v805 = vadd.f32 %v330, %v804
        %v806 = vpop.f32.mrb[0].mxu0
        %v807 = vadd.f32 %v334, %v806
        %808 = vmatprep.mubr.bf16.mxu0 0
        %809 = vmatmul.mubr.bf16.gmra.mrb[0].mxu0 %v645
        %v810 = vpop.f32.mrb[0].mxu0
        %v811 = vadd.f32 %v330, %v810
        %v812 = vpop.f32.mrb[0].mxu0
        %v813 = vadd.f32 %v334, %v812
        %v814 = vpop.f32.mrb[0].mxu0
        %v815 = vadd.f32 %v330, %v814
        %v816 = vpop.f32.mrb[0].mxu0
        %v817 = vadd.f32 %v334, %v816
        %818 = vmatprep.mubr.bf16.mxu0 0
        %819 = vmatmul.mubr.bf16.gmra.mrb[0].mxu0 %v648
        %v820 = vpop.f32.mrb[0].mxu0
        %v821 = vadd.f32 %v330, %v820
        %v822 = vpop.f32.mrb[0].mxu0
        %v823 = vadd.f32 %v334, %v822
        %v824 = vpop.f32.mrb[0].mxu0
        %v825 = vadd.f32 %v330, %v824
        %v826 = vpop.f32.mrb[0].mxu0
        %v827 = vadd.f32 %v334, %v826
        %828 = vmatprep.mubr.bf16.mxu0 0
        %829 = vmatmul.mubr.bf16.gmra.mrb[0].mxu0 %v651
        %v830 = vpop.f32.mrb[0].mxu0
        %v831 = vadd.f32 %v330, %v830
        %v832 = vpop.f32.mrb[0].mxu0
        %v833 = vadd.f32 %v334, %v832
        %v834 = vpop.f32.mrb[0].mxu0
        %v835 = vadd.f32 %v330, %v834
        %v836 = vpop.f32.mrb[0].mxu0
        %v837 = vadd.f32 %v334, %v836
        %838 = vmatprep.mubr.bf16.mxu0 0
        %839 = vmatmul.mubr.bf16.gmra.mrb[0].mxu0 %v654
        %v840 = vpop.f32.mrb[0].mxu0
        %v841 = vadd.f32 %v330, %v840
        %v842 = vpop.f32.mrb[0].mxu0
        %v843 = vadd.f32 %v334, %v842
        %v844 = vpop.f32.mrb[0].mxu0
        %v845 = vadd.f32 %v330, %v844
        %v846 = vpop.f32.mrb[0].mxu0
        %v847 = vadd.f32 %v334, %v846
        %848 = vdwg.mxu0
        %849 = vmatprep.subr.bf16.mxu0 %v550
        %850 = vmatpush1.bf16.msra.mxu0 %v549
        %851 = vmatprep.subr.bf16.mxu0 %v560
        %852 = vmatpush1.bf16.msra.mxu0 %v559
        %853 = vmatprep.subr.bf16.mxu0 %v570
        %854 = vmatpush1.bf16.msra.mxu0 %v569
        %855 = vmatprep.subr.bf16.mxu0 0
        %856 = vmatpush1.bf16.msra.mxu0 0
        %857 = vmatprep.subr.bf16.mxu0 0
        %858 = vmatpush1.bf16.msra.mxu0 0
        %859 = vmatprep.subr.bf16.mxu0 0
        %860 = vmatpush1.bf16.msra.mxu0 0
        %861 = vmatprep.subr.bf16.mxu0 0
        %862 = vmatpush1.bf16.msra.mxu0 0
        %863 = vmatprep.subr.bf16.mxu0 0
        %864 = vmatpush1.bf16.msra.mxu0 0
        %865 = vmatprep.subr.bf16.mxu0 0
        %866 = vmatpush1.bf16.msra.mxu0 0
        %867 = vmatprep.subr.bf16.mxu0 0
        %868 = vmatpush1.bf16.msra.mxu0 0
        %869 = vmatprep.subr.bf16.mxu0 0
        %870 = vmatpush1.bf16.msra.mxu0 0
        %871 = vmatprep.subr.bf16.mxu0 0
        %872 = vmatpush1.bf16.msra.mxu0 0
        %873 = vmatprep.subr.bf16.mxu0 0
        %874 = vmatpush1.bf16.msra.mxu0 0
        %875 = vmatprep.subr.bf16.mxu0 0
        %876 = vmatpush1.bf16.msra.mxu0 0
        %877 = vmatprep.subr.bf16.mxu0 0
        %878 = vmatpush1.bf16.msra.mxu0 0
        %879 = vmatprep.subr.bf16.mxu0 0
        %880 = vmatpush1.bf16.msra.mxu0 0
        %881 = vmatprep.mubr.bf16.mxu0 0
        %882 = vmatmul.mubr.bf16.gmra.mrb[0].mxu0 %v609
        %v883 = vpop.f32.mrb[0].mxu0
        %v884 = vadd.f32 %v338, %v883
        %v885 = vpop.f32.mrb[0].mxu0
        %v886 = vadd.f32 %v342, %v885
        %v887 = vpop.f32.mrb[0].mxu0
        %v888 = vadd.f32 %v338, %v887
        %v889 = vpop.f32.mrb[0].mxu0
        %v890 = vadd.f32 %v342, %v889
        %891 = vmatprep.mubr.bf16.mxu0 0
        %892 = vmatmul.mubr.bf16.gmra.mrb[0].mxu0 %v612
        %v893 = vpop.f32.mrb[0].mxu0
        %v894 = vadd.f32 %v338, %v893
        %v895 = vpop.f32.mrb[0].mxu0
        %v896 = vadd.f32 %v342, %v895
        %v897 = vpop.f32.mrb[0].mxu0
        %v898 = vadd.f32 %v338, %v897
        %v899 = vpop.f32.mrb[0].mxu0
        %v900 = vadd.f32 %v342, %v899
        %901 = vmatprep.mubr.bf16.mxu0 0
        %902 = vmatmul.mubr.bf16.gmra.mrb[0].mxu0 %v615
        %v903 = vpop.f32.mrb[0].mxu0
        %v904 = vadd.f32 %v338, %v903
        %v905 = vpop.f32.mrb[0].mxu0
        %v906 = vadd.f32 %v342, %v905
        %v907 = vpop.f32.mrb[0].mxu0
        %v908 = vadd.f32 %v338, %v907
        %v909 = vpop.f32.mrb[0].mxu0
        %v910 = vadd.f32 %v342, %v909
        %911 = vmatprep.mubr.bf16.mxu0 0
        %912 = vmatmul.mubr.bf16.gmra.mrb[0].mxu0 %v618
        %v913 = vpop.f32.mrb[0].mxu0
        %v914 = vadd.f32 %v338, %v913
        %v915 = vpop.f32.mrb[0].mxu0
        %v916 = vadd.f32 %v342, %v915
        %v917 = vpop.f32.mrb[0].mxu0
        %v918 = vadd.f32 %v338, %v917
        %v919 = vpop.f32.mrb[0].mxu0
        %v920 = vadd.f32 %v342, %v919
        %921 = vmatprep.mubr.bf16.mxu0 0
        %922 = vmatmul.mubr.bf16.gmra.mrb[0].mxu0 %v621
        %v923 = vpop.f32.mrb[0].mxu0
        %v924 = vadd.f32 %v338, %v923
        %v925 = vpop.f32.mrb[0].mxu0
        %v926 = vadd.f32 %v342, %v925
        %v927 = vpop.f32.mrb[0].mxu0
        %v928 = vadd.f32 %v338, %v927
        %v929 = vpop.f32.mrb[0].mxu0
        %v930 = vadd.f32 %v342, %v929
        %931 = vmatprep.mubr.bf16.mxu0 0
        %932 = vmatmul.mubr.bf16.gmra.mrb[0].mxu0 %v624
        %v933 = vpop.f32.mrb[0].mxu0
        %v934 = vadd.f32 %v338, %v933
        %v935 = vpop.f32.mrb[0].mxu0
        %v936 = vadd.f32 %v342, %v935
        %v937 = vpop.f32.mrb[0].mxu0
        %v938 = vadd.f32 %v338, %v937
        %v939 = vpop.f32.mrb[0].mxu0
        %v940 = vadd.f32 %v342, %v939
        %941 = vmatprep.mubr.bf16.mxu0 0
        %942 = vmatmul.mubr.bf16.gmra.mrb[0].mxu0 %v627
        %v943 = vpop.f32.mrb[0].mxu0
        %v944 = vadd.f32 %v338, %v943
        %v945 = vpop.f32.mrb[0].mxu0
        %v946 = vadd.f32 %v342, %v945
        %v947 = vpop.f32.mrb[0].mxu0
        %v948 = vadd.f32 %v338, %v947
        %v949 = vpop.f32.mrb[0].mxu0
        %v950 = vadd.f32 %v342, %v949
        %951 = vmatprep.mubr.bf16.mxu0 0
        %952 = vmatmul.mubr.bf16.gmra.mrb[0].mxu0 %v630
        %v953 = vpop.f32.mrb[0].mxu0
        %v954 = vadd.f32 %v338, %v953
        %v955 = vpop.f32.mrb[0].mxu0
        %v956 = vadd.f32 %v342, %v955
        %v957 = vpop.f32.mrb[0].mxu0
        %v958 = vadd.f32 %v338, %v957
        %v959 = vpop.f32.mrb[0].mxu0
        %v960 = vadd.f32 %v342, %v959
        %961 = vmatprep.mubr.bf16.mxu0 0
        %962 = vmatmul.mubr.bf16.gmra.mrb[0].mxu0 %v633
        %v963 = vpop.f32.mrb[0].mxu0
        %v964 = vadd.f32 %v338, %v963
        %v965 = vpop.f32.mrb[0].mxu0
        %v966 = vadd.f32 %v342, %v965
        %v967 = vpop.f32.mrb[0].mxu0
        %v968 = vadd.f32 %v338, %v967
        %v969 = vpop.f32.mrb[0].mxu0
        %v970 = vadd.f32 %v342, %v969
        %971 = vmatprep.mubr.bf16.mxu0 0
        %972 = vmatmul.mubr.bf16.gmra.mrb[0].mxu0 %v636
        %v973 = vpop.f32.mrb[0].mxu0
        %v974 = vadd.f32 %v338, %v973
        %v975 = vpop.f32.mrb[0].mxu0
        %v976 = vadd.f32 %v342, %v975
        %v977 = vpop.f32.mrb[0].mxu0
        %v978 = vadd.f32 %v338, %v977
        %v979 = vpop.f32.mrb[0].mxu0
        %v980 = vadd.f32 %v342, %v979
        %981 = vmatprep.mubr.bf16.mxu0 0
        %982 = vmatmul.mubr.bf16.gmra.mrb[0].mxu0 %v639
        %v983 = vpop.f32.mrb[0].mxu0
        %v984 = vadd.f32 %v338, %v983
        %v985 = vpop.f32.mrb[0].mxu0
        %v986 = vadd.f32 %v342, %v985
        %v987 = vpop.f32.mrb[0].mxu0
        %v988 = vadd.f32 %v338, %v987
        %v989 = vpop.f32.mrb[0].mxu0
        %v990 = vadd.f32 %v342, %v989
        %991 = vmatprep.mubr.bf16.mxu0 0
        %992 = vmatmul.mubr.bf16.gmra.mrb[0].mxu0 %v642
        %v993 = vpop.f32.mrb[0].mxu0
        %v994 = vadd.f32 %v338, %v993
        %v995 = vpop.f32.mrb[0].mxu0
        %v996 = vadd.f32 %v342, %v995
        %v997 = vpop.f32.mrb[0].mxu0
        %v998 = vadd.f32 %v338, %v997
        %v999 = vpop.f32.mrb[0].mxu0
        %v1000 = vadd.f32 %v342, %v999
        %1001 = vmatprep.mubr.bf16.mxu0 0
        %1002 = vmatmul.mubr.bf16.gmra.mrb[0].mxu0 %v645
        %v1003 = vpop.f32.mrb[0].mxu0
        %v1004 = vadd.f32 %v338, %v1003
        %v1005 = vpop.f32.mrb[0].mxu0
        %v1006 = vadd.f32 %v342, %v1005
        %v1007 = vpop.f32.mrb[0].mxu0
        %v1008 = vadd.f32 %v338, %v1007
        %v1009 = vpop.f32.mrb[0].mxu0
        %v1010 = vadd.f32 %v342, %v1009
        %1011 = vmatprep.mubr.bf16.mxu0 0
        %1012 = vmatmul.mubr.bf16.gmra.mrb[0].mxu0 %v648
        %v1013 = vpop.f32.mrb[0].mxu0
        %v1014 = vadd.f32 %v338, %v1013
        %v1015 = vpop.f32.mrb[0].mxu0
        %v1016 = vadd.f32 %v342, %v1015
        %v1017 = vpop.f32.mrb[0].mxu0
        %v1018 = vadd.f32 %v338, %v1017
        %v1019 = vpop.f32.mrb[0].mxu0
        %v1020 = vadd.f32 %v342, %v1019
        %1021 = vmatprep.mubr.bf16.mxu0 0
        %1022 = vmatmul.mubr.bf16.gmra.mrb[0].mxu0 %v651
        %v1023 = vpop.f32.mrb[0].mxu0
        %v1024 = vadd.f32 %v338, %v1023
        %v1025 = vpop.f32.mrb[0].mxu0
        %v1026 = vadd.f32 %v342, %v1025
        %v1027 = vpop.f32.mrb[0].mxu0
        %v1028 = vadd.f32 %v338, %v1027
        %v1029 = vpop.f32.mrb[0].mxu0
        %v1030 = vadd.f32 %v342, %v1029
        %1031 = vmatprep.mubr.bf16.mxu0 0
        %1032 = vmatmul.mubr.bf16.gmra.mrb[0].mxu0 %v654
        %v1033 = vpop.f32.mrb[0].mxu0
        %v1034 = vadd.f32 %v338, %v1033
        %v1035 = vpop.f32.mrb[0].mxu0
        %v1036 = vadd.f32 %v342, %v1035
        %v1037 = vpop.f32.mrb[0].mxu0
        %v1038 = vadd.f32 %v338, %v1037
        %v1039 = vpop.f32.mrb[0].mxu0
        %v1040 = vadd.f32 %v342, %v1039
        %1041 = vdwg.mxu0
        %1042 = vmatprep.subr.bf16.mxu0 %v552
        %1043 = vmatpush1.bf16.msra.mxu0 %v551
        %1044 = vmatprep.subr.bf16.mxu0 %v562
        %1045 = vmatpush1.bf16.msra.mxu0 %v561
        %1046 = vmatprep.subr.bf16.mxu0 %v572
        %1047 = vmatpush1.bf16.msra.mxu0 %v571
        %1048 = vmatprep.subr.bf16.mxu0 0
        %1049 = vmatpush1.bf16.msra.mxu0 0
        %1050 = vmatprep.subr.bf16.mxu0 0
        %1051 = vmatpush1.bf16.msra.mxu0 0
        %1052 = vmatprep.subr.bf16.mxu0 0
        %1053 = vmatpush1.bf16.msra.mxu0 0
        %1054 = vmatprep.subr.bf16.mxu0 0
        %1055 = vmatpush1.bf16.msra.mxu0 0
        %1056 = vmatprep.subr.bf16.mxu0 0
        %1057 = vmatpush1.bf16.msra.mxu0 0
        %1058 = vmatprep.subr.bf16.mxu0 0
        %1059 = vmatpush1.bf16.msra.mxu0 0
        %1060 = vmatprep.subr.bf16.mxu0 0
        %1061 = vmatpush1.bf16.msra.mxu0 0
        %1062 = vmatprep.subr.bf16.mxu0 0
        %1063 = vmatpush1.bf16.msra.mxu0 0
        %1064 = vmatprep.subr.bf16.mxu0 0
        %1065 = vmatpush1.bf16.msra.mxu0 0
        %1066 = vmatprep.subr.bf16.mxu0 0
        %1067 = vmatpush1.bf16.msra.mxu0 0
        %1068 = vmatprep.subr.bf16.mxu0 0
        %1069 = vmatpush1.bf16.msra.mxu0 0
        %1070 = vmatprep.subr.bf16.mxu0 0
        %1071 = vmatpush1.bf16.msra.mxu0 0
        %1072 = vmatprep.subr.bf16.mxu0 0
        %1073 = vmatpush1.bf16.msra.mxu0 0
        %1074 = vmatprep.mubr.bf16.mxu0 0
        %1075 = vmatmul.mubr.bf16.gmra.mrb[0].mxu0 %v609
        %v1076 = vpop.f32.mrb[0].mxu0
        %v1077 = vadd.f32 %v346, %v1076
        %v1078 = vpop.f32.mrb[0].mxu0
        %v1079 = vadd.f32 %v350, %v1078
        %v1080 = vpop.f32.mrb[0].mxu0
        %v1081 = vadd.f32 %v346, %v1080
        %v1082 = vpop.f32.mrb[0].mxu0
        %v1083 = vadd.f32 %v350, %v1082
        %1084 = vmatprep.mubr.bf16.mxu0 0
        %1085 = vmatmul.mubr.bf16.gmra.mrb[0].mxu0 %v612
        %v1086 = vpop.f32.mrb[0].mxu0
        %v1087 = vadd.f32 %v346, %v1086
        %v1088 = vpop.f32.mrb[0].mxu0
        %v1089 = vadd.f32 %v350, %v1088
        %v1090 = vpop.f32.mrb[0].mxu0
        %v1091 = vadd.f32 %v346, %v1090
        %v1092 = vpop.f32.mrb[0].mxu0
        %v1093 = vadd.f32 %v350, %v1092
        %1094 = vmatprep.mubr.bf16.mxu0 0
        %1095 = vmatmul.mubr.bf16.gmra.mrb[0].mxu0 %v615
        %v1096 = vpop.f32.mrb[0].mxu0
        %v1097 = vadd.f32 %v346, %v1096
        %v1098 = vpop.f32.mrb[0].mxu0
        %v1099 = vadd.f32 %v350, %v1098
        %v1100 = vpop.f32.mrb[0].mxu0
        %v1101 = vadd.f32 %v346, %v1100
        %v1102 = vpop.f32.mrb[0].mxu0
        %v1103 = vadd.f32 %v350, %v1102
        %1104 = vmatprep.mubr.bf16.mxu0 0
        %1105 = vmatmul.mubr.bf16.gmra.mrb[0].mxu0 %v618
        %v1106 = vpop.f32.mrb[0].mxu0
        %v1107 = vadd.f32 %v346, %v1106
        %v1108 = vpop.f32.mrb[0].mxu0
        %v1109 = vadd.f32 %v350, %v1108
        %v1110 = vpop.f32.mrb[0].mxu0
        %v1111 = vadd.f32 %v346, %v1110
        %v1112 = vpop.f32.mrb[0].mxu0
        %v1113 = vadd.f32 %v350, %v1112
        %1114 = vmatprep.mubr.bf16.mxu0 0
        %1115 = vmatmul.mubr.bf16.gmra.mrb[0].mxu0 %v621
        %v1116 = vpop.f32.mrb[0].mxu0
        %v1117 = vadd.f32 %v346, %v1116
        %v1118 = vpop.f32.mrb[0].mxu0
        %v1119 = vadd.f32 %v350, %v1118
        %v1120 = vpop.f32.mrb[0].mxu0
        %v1121 = vadd.f32 %v346, %v1120
        %v1122 = vpop.f32.mrb[0].mxu0
        %v1123 = vadd.f32 %v350, %v1122
        %1124 = vmatprep.mubr.bf16.mxu0 0
        %1125 = vmatmul.mubr.bf16.gmra.mrb[0].mxu0 %v624
        %v1126 = vpop.f32.mrb[0].mxu0
        %v1127 = vadd.f32 %v346, %v1126
        %v1128 = vpop.f32.mrb[0].mxu0
        %v1129 = vadd.f32 %v350, %v1128
        %v1130 = vpop.f32.mrb[0].mxu0
        %v1131 = vadd.f32 %v346, %v1130
        %v1132 = vpop.f32.mrb[0].mxu0
        %v1133 = vadd.f32 %v350, %v1132
        %1134 = vmatprep.mubr.bf16.mxu0 0
        %1135 = vmatmul.mubr.bf16.gmra.mrb[0].mxu0 %v627
        %v1136 = vpop.f32.mrb[0].mxu0
        %v1137 = vadd.f32 %v346, %v1136
        %v1138 = vpop.f32.mrb[0].mxu0
        %v1139 = vadd.f32 %v350, %v1138
        %v1140 = vpop.f32.mrb[0].mxu0
        %v1141 = vadd.f32 %v346, %v1140
        %v1142 = vpop.f32.mrb[0].mxu0
        %v1143 = vadd.f32 %v350, %v1142
        %1144 = vmatprep.mubr.bf16.mxu0 0
        %1145 = vmatmul.mubr.bf16.gmra.mrb[0].mxu0 %v630
        %v1146 = vpop.f32.mrb[0].mxu0
        %v1147 = vadd.f32 %v346, %v1146
        %v1148 = vpop.f32.mrb[0].mxu0
        %v1149 = vadd.f32 %v350, %v1148
        %v1150 = vpop.f32.mrb[0].mxu0
        %v1151 = vadd.f32 %v346, %v1150
        %v1152 = vpop.f32.mrb[0].mxu0
        %v1153 = vadd.f32 %v350, %v1152
        %1154 = vmatprep.mubr.bf16.mxu0 0
        %1155 = vmatmul.mubr.bf16.gmra.mrb[0].mxu0 %v633
        %v1156 = vpop.f32.mrb[0].mxu0
        %v1157 = vadd.f32 %v346, %v1156
        %v1158 = vpop.f32.mrb[0].mxu0
        %v1159 = vadd.f32 %v350, %v1158
        %v1160 = vpop.f32.mrb[0].mxu0
        %v1161 = vadd.f32 %v346, %v1160
        %v1162 = vpop.f32.mrb[0].mxu0
        %v1163 = vadd.f32 %v350, %v1162
        %1164 = vmatprep.mubr.bf16.mxu0 0
        %1165 = vmatmul.mubr.bf16.gmra.mrb[0].mxu0 %v636
        %v1166 = vpop.f32.mrb[0].mxu0
        %v1167 = vadd.f32 %v346, %v1166
        %v1168 = vpop.f32.mrb[0].mxu0
        %v1169 = vadd.f32 %v350, %v1168
        %v1170 = vpop.f32.mrb[0].mxu0
        %v1171 = vadd.f32 %v346, %v1170
        %v1172 = vpop.f32.mrb[0].mxu0
        %v1173 = vadd.f32 %v350, %v1172
        %1174 = vmatprep.mubr.bf16.mxu0 0
        %1175 = vmatmul.mubr.bf16.gmra.mrb[0].mxu0 %v639
        %v1176 = vpop.f32.mrb[0].mxu0
        %v1177 = vadd.f32 %v346, %v1176
        %v1178 = vpop.f32.mrb[0].mxu0
        %v1179 = vadd.f32 %v350, %v1178
        %v1180 = vpop.f32.mrb[0].mxu0
        %v1181 = vadd.f32 %v346, %v1180
        %v1182 = vpop.f32.mrb[0].mxu0
        %v1183 = vadd.f32 %v350, %v1182
        %1184 = vmatprep.mubr.bf16.mxu0 0
        %1185 = vmatmul.mubr.bf16.gmra.mrb[0].mxu0 %v642
        %v1186 = vpop.f32.mrb[0].mxu0
        %v1187 = vadd.f32 %v346, %v1186
        %v1188 = vpop.f32.mrb[0].mxu0
        %v1189 = vadd.f32 %v350, %v1188
        %v1190 = vpop.f32.mrb[0].mxu0
        %v1191 = vadd.f32 %v346, %v1190
        %v1192 = vpop.f32.mrb[0].mxu0
        %v1193 = vadd.f32 %v350, %v1192
        %1194 = vmatprep.mubr.bf16.mxu0 0
        %1195 = vmatmul.mubr.bf16.gmra.mrb[0].mxu0 %v645
        %v1196 = vpop.f32.mrb[0].mxu0
        %v1197 = vadd.f32 %v346, %v1196
        %v1198 = vpop.f32.mrb[0].mxu0
        %v1199 = vadd.f32 %v350, %v1198
        %v1200 = vpop.f32.mrb[0].mxu0
        %v1201 = vadd.f32 %v346, %v1200
        %v1202 = vpop.f32.mrb[0].mxu0
        %v1203 = vadd.f32 %v350, %v1202
        %1204 = vmatprep.mubr.bf16.mxu0 0
        %1205 = vmatmul.mubr.bf16.gmra.mrb[0].mxu0 %v648
        %v1206 = vpop.f32.mrb[0].mxu0
        %v1207 = vadd.f32 %v346, %v1206
        %v1208 = vpop.f32.mrb[0].mxu0
        %v1209 = vadd.f32 %v350, %v1208
        %v1210 = vpop.f32.mrb[0].mxu0
        %v1211 = vadd.f32 %v346, %v1210
        %v1212 = vpop.f32.mrb[0].mxu0
        %v1213 = vadd.f32 %v350, %v1212
        %1214 = vmatprep.mubr.bf16.mxu0 0
        %1215 = vmatmul.mubr.bf16.gmra.mrb[0].mxu0 %v651
        %v1216 = vpop.f32.mrb[0].mxu0
        %v1217 = vadd.f32 %v346, %v1216
        %v1218 = vpop.f32.mrb[0].mxu0
        %v1219 = vadd.f32 %v350, %v1218
        %v1220 = vpop.f32.mrb[0].mxu0
        %v1221 = vadd.f32 %v346, %v1220
        %v1222 = vpop.f32.mrb[0].mxu0
        %v1223 = vadd.f32 %v350, %v1222
        %1224 = vmatprep.mubr.bf16.mxu0 0
        %1225 = vmatmul.mubr.bf16.gmra.mrb[0].mxu0 %v654
        %v1226 = vpop.f32.mrb[0].mxu0
        %v1227 = vadd.f32 %v346, %v1226
        %v1228 = vpop.f32.mrb[0].mxu0
        %v1229 = vadd.f32 %v350, %v1228
        %v1230 = vpop.f32.mrb[0].mxu0
        %v1231 = vadd.f32 %v346, %v1230
        %v1232 = vpop.f32.mrb[0].mxu0
        %v1233 = vadd.f32 %v350, %v1232
        %1234 = vdwg.mxu0
        %1235 = vmatprep.subr.bf16.mxu0 %v554
        %1236 = vmatpush1.bf16.msra.mxu0 %v553
        %1237 = vmatprep.subr.bf16.mxu0 %v564
        %1238 = vmatpush1.bf16.msra.mxu0 %v563
        %1239 = vmatprep.subr.bf16.mxu0 %v574
        %1240 = vmatpush1.bf16.msra.mxu0 %v573
        %1241 = vmatprep.subr.bf16.mxu0 0
        %1242 = vmatpush1.bf16.msra.mxu0 0
        %1243 = vmatprep.subr.bf16.mxu0 0
        %1244 = vmatpush1.bf16.msra.mxu0 0
        %1245 = vmatprep.subr.bf16.mxu0 0
        %1246 = vmatpush1.bf16.msra.mxu0 0
        %1247 = vmatprep.subr.bf16.mxu0 0
        %1248 = vmatpush1.bf16.msra.mxu0 0
        %1249 = vmatprep.subr.bf16.mxu0 0
        %1250 = vmatpush1.bf16.msra.mxu0 0
        %1251 = vmatprep.subr.bf16.mxu0 0
        %1252 = vmatpush1.bf16.msra.mxu0 0
        %1253 = vmatprep.subr.bf16.mxu0 0
        %1254 = vmatpush1.bf16.msra.mxu0 0
        %1255 = vmatprep.subr.bf16.mxu0 0
        %1256 = vmatpush1.bf16.msra.mxu0 0
        %1257 = vmatprep.subr.bf16.mxu0 0
        %1258 = vmatpush1.bf16.msra.mxu0 0
        %1259 = vmatprep.subr.bf16.mxu0 0
        %1260 = vmatpush1.bf16.msra.mxu0 0
        %1261 = vmatprep.subr.bf16.mxu0 0
        %1262 = vmatpush1.bf16.msra.mxu0 0
        %1263 = vmatprep.subr.bf16.mxu0 0
        %1264 = vmatpush1.bf16.msra.mxu0 0
        %1265 = vmatprep.subr.bf16.mxu0 0
        %1266 = vmatpush1.bf16.msra.mxu0 0
        %1267 = vmatprep.mubr.bf16.mxu0 0
        %1268 = vmatmul.mubr.bf16.gmra.mrb[0].mxu0 %v609
        %v1269 = vpop.f32.mrb[0].mxu0
        %v1270 = vadd.f32 %v354, %v1269
        %v1271 = vpop.f32.mrb[0].mxu0
        %v1272 = vadd.f32 %v358, %v1271
        %v1273 = vpop.f32.mrb[0].mxu0
        %v1274 = vadd.f32 %v354, %v1273
        %v1275 = vpop.f32.mrb[0].mxu0
        %v1276 = vadd.f32 %v358, %v1275
        %1277 = vmatprep.mubr.bf16.mxu0 0
        %1278 = vmatmul.mubr.bf16.gmra.mrb[0].mxu0 %v612
        %v1279 = vpop.f32.mrb[0].mxu0
        %v1280 = vadd.f32 %v354, %v1279
        %v1281 = vpop.f32.mrb[0].mxu0
        %v1282 = vadd.f32 %v358, %v1281
        %v1283 = vpop.f32.mrb[0].mxu0
        %v1284 = vadd.f32 %v354, %v1283
        %v1285 = vpop.f32.mrb[0].mxu0
        %v1286 = vadd.f32 %v358, %v1285
        %1287 = vmatprep.mubr.bf16.mxu0 0
        %1288 = vmatmul.mubr.bf16.gmra.mrb[0].mxu0 %v615
        %v1289 = vpop.f32.mrb[0].mxu0
        %v1290 = vadd.f32 %v354, %v1289
        %v1291 = vpop.f32.mrb[0].mxu0
        %v1292 = vadd.f32 %v358, %v1291
        %v1293 = vpop.f32.mrb[0].mxu0
        %v1294 = vadd.f32 %v354, %v1293
        %v1295 = vpop.f32.mrb[0].mxu0
        %v1296 = vadd.f32 %v358, %v1295
        %1297 = vmatprep.mubr.bf16.mxu0 0
        %1298 = vmatmul.mubr.bf16.gmra.mrb[0].mxu0 %v618
        %v1299 = vpop.f32.mrb[0].mxu0
        %v1300 = vadd.f32 %v354, %v1299
        %v1301 = vpop.f32.mrb[0].mxu0
        %v1302 = vadd.f32 %v358, %v1301
        %v1303 = vpop.f32.mrb[0].mxu0
        %v1304 = vadd.f32 %v354, %v1303
        %v1305 = vpop.f32.mrb[0].mxu0
        %v1306 = vadd.f32 %v358, %v1305
        %1307 = vmatprep.mubr.bf16.mxu0 0
        %1308 = vmatmul.mubr.bf16.gmra.mrb[0].mxu0 %v621
        %v1309 = vpop.f32.mrb[0].mxu0
        %v1310 = vadd.f32 %v354, %v1309
        %v1311 = vpop.f32.mrb[0].mxu0
        %v1312 = vadd.f32 %v358, %v1311
        %v1313 = vpop.f32.mrb[0].mxu0
        %v1314 = vadd.f32 %v354, %v1313
        %v1315 = vpop.f32.mrb[0].mxu0
        %v1316 = vadd.f32 %v358, %v1315
        %1317 = vmatprep.mubr.bf16.mxu0 0
        %1318 = vmatmul.mubr.bf16.gmra.mrb[0].mxu0 %v624
        %v1319 = vpop.f32.mrb[0].mxu0
        %v1320 = vadd.f32 %v354, %v1319
        %v1321 = vpop.f32.mrb[0].mxu0
        %v1322 = vadd.f32 %v358, %v1321
        %v1323 = vpop.f32.mrb[0].mxu0
        %v1324 = vadd.f32 %v354, %v1323
        %v1325 = vpop.f32.mrb[0].mxu0
        %v1326 = vadd.f32 %v358, %v1325
        %1327 = vmatprep.mubr.bf16.mxu0 0
        %1328 = vmatmul.mubr.bf16.gmra.mrb[0].mxu0 %v627
        %v1329 = vpop.f32.mrb[0].mxu0
        %v1330 = vadd.f32 %v354, %v1329
        %v1331 = vpop.f32.mrb[0].mxu0
        %v1332 = vadd.f32 %v358, %v1331
        %v1333 = vpop.f32.mrb[0].mxu0
        %v1334 = vadd.f32 %v354, %v1333
        %v1335 = vpop.f32.mrb[0].mxu0
        %v1336 = vadd.f32 %v358, %v1335
        %1337 = vmatprep.mubr.bf16.mxu0 0
        %1338 = vmatmul.mubr.bf16.gmra.mrb[0].mxu0 %v630
        %v1339 = vpop.f32.mrb[0].mxu0
        %v1340 = vadd.f32 %v354, %v1339
        %v1341 = vpop.f32.mrb[0].mxu0
        %v1342 = vadd.f32 %v358, %v1341
        %v1343 = vpop.f32.mrb[0].mxu0
        %v1344 = vadd.f32 %v354, %v1343
        %v1345 = vpop.f32.mrb[0].mxu0
        %v1346 = vadd.f32 %v358, %v1345
        %1347 = vmatprep.mubr.bf16.mxu0 0
        %1348 = vmatmul.mubr.bf16.gmra.mrb[0].mxu0 %v633
        %v1349 = vpop.f32.mrb[0].mxu0
        %v1350 = vadd.f32 %v354, %v1349
        %v1351 = vpop.f32.mrb[0].mxu0
        %v1352 = vadd.f32 %v358, %v1351
        %v1353 = vpop.f32.mrb[0].mxu0
        %v1354 = vadd.f32 %v354, %v1353
        %v1355 = vpop.f32.mrb[0].mxu0
        %v1356 = vadd.f32 %v358, %v1355
        %1357 = vmatprep.mubr.bf16.mxu0 0
        %1358 = vmatmul.mubr.bf16.gmra.mrb[0].mxu0 %v636
        %v1359 = vpop.f32.mrb[0].mxu0
        %v1360 = vadd.f32 %v354, %v1359
        %v1361 = vpop.f32.mrb[0].mxu0
        %v1362 = vadd.f32 %v358, %v1361
        %v1363 = vpop.f32.mrb[0].mxu0
        %v1364 = vadd.f32 %v354, %v1363
        %v1365 = vpop.f32.mrb[0].mxu0
        %v1366 = vadd.f32 %v358, %v1365
        %1367 = vmatprep.mubr.bf16.mxu0 0
        %1368 = vmatmul.mubr.bf16.gmra.mrb[0].mxu0 %v639
        %v1369 = vpop.f32.mrb[0].mxu0
        %v1370 = vadd.f32 %v354, %v1369
        %v1371 = vpop.f32.mrb[0].mxu0
        %v1372 = vadd.f32 %v358, %v1371
        %v1373 = vpop.f32.mrb[0].mxu0
        %v1374 = vadd.f32 %v354, %v1373
        %v1375 = vpop.f32.mrb[0].mxu0
        %v1376 = vadd.f32 %v358, %v1375
        %1377 = vmatprep.mubr.bf16.mxu0 0
        %1378 = vmatmul.mubr.bf16.gmra.mrb[0].mxu0 %v642
        %v1379 = vpop.f32.mrb[0].mxu0
        %v1380 = vadd.f32 %v354, %v1379
        %v1381 = vpop.f32.mrb[0].mxu0
        %v1382 = vadd.f32 %v358, %v1381
        %v1383 = vpop.f32.mrb[0].mxu0
        %v1384 = vadd.f32 %v354, %v1383
        %v1385 = vpop.f32.mrb[0].mxu0
        %v1386 = vadd.f32 %v358, %v1385
        %1387 = vmatprep.mubr.bf16.mxu0 0
        %1388 = vmatmul.mubr.bf16.gmra.mrb[0].mxu0 %v645
        %v1389 = vpop.f32.mrb[0].mxu0
        %v1390 = vadd.f32 %v354, %v1389
        %v1391 = vpop.f32.mrb[0].mxu0
        %v1392 = vadd.f32 %v358, %v1391
        %v1393 = vpop.f32.mrb[0].mxu0
        %v1394 = vadd.f32 %v354, %v1393
        %v1395 = vpop.f32.mrb[0].mxu0
        %v1396 = vadd.f32 %v358, %v1395
        %1397 = vmatprep.mubr.bf16.mxu0 0
        %1398 = vmatmul.mubr.bf16.gmra.mrb[0].mxu0 %v648
        %v1399 = vpop.f32.mrb[0].mxu0
        %v1400 = vadd.f32 %v354, %v1399
        %v1401 = vpop.f32.mrb[0].mxu0
        %v1402 = vadd.f32 %v358, %v1401
        %v1403 = vpop.f32.mrb[0].mxu0
        %v1404 = vadd.f32 %v354, %v1403
        %v1405 = vpop.f32.mrb[0].mxu0
        %v1406 = vadd.f32 %v358, %v1405
        %1407 = vmatprep.mubr.bf16.mxu0 0
        %1408 = vmatmul.mubr.bf16.gmra.mrb[0].mxu0 %v651
        %v1409 = vpop.f32.mrb[0].mxu0
        %v1410 = vadd.f32 %v354, %v1409
        %v1411 = vpop.f32.mrb[0].mxu0
        %v1412 = vadd.f32 %v358, %v1411
        %v1413 = vpop.f32.mrb[0].mxu0
        %v1414 = vadd.f32 %v354, %v1413
        %v1415 = vpop.f32.mrb[0].mxu0
        %v1416 = vadd.f32 %v358, %v1415
        %1417 = vmatprep.mubr.bf16.mxu0 0
        %1418 = vmatmul.mubr.bf16.gmra.mrb[0].mxu0 %v654
        %v1419 = vpop.f32.mrb[0].mxu0
        %v1420 = vadd.f32 %v354, %v1419
        %v1421 = vpop.f32.mrb[0].mxu0
        %v1422 = vadd.f32 %v358, %v1421
        %v1423 = vpop.f32.mrb[0].mxu0
        %v1424 = vadd.f32 %v354, %v1423
        %v1425 = vpop.f32.mrb[0].mxu0
        %v1426 = vadd.f32 %v358, %v1425
        %1427 = vdwg.mxu0
        %1428 = vmatprep.subr.bf16.mxu0 %v556
        %1429 = vmatpush1.bf16.msra.mxu0 %v555
        %1430 = vmatprep.subr.bf16.mxu0 %v566
        %1431 = vmatpush1.bf16.msra.mxu0 %v565
        %1432 = vmatprep.subr.bf16.mxu0 %v576
        %1433 = vmatpush1.bf16.msra.mxu0 %v575
        %1434 = vmatprep.subr.bf16.mxu0 0
        %1435 = vmatpush1.bf16.msra.mxu0 0
        %1436 = vmatprep.subr.bf16.mxu0 0
        %1437 = vmatpush1.bf16.msra.mxu0 0
        %1438 = vmatprep.subr.bf16.mxu0 0
        %1439 = vmatpush1.bf16.msra.mxu0 0
        %1440 = vmatprep.subr.bf16.mxu0 0
        %1441 = vmatpush1.bf16.msra.mxu0 0
        %1442 = vmatprep.subr.bf16.mxu0 0
        %1443 = vmatpush1.bf16.msra.mxu0 0
        %1444 = vmatprep.subr.bf16.mxu0 0
        %1445 = vmatpush1.bf16.msra.mxu0 0
        %1446 = vmatprep.subr.bf16.mxu0 0
        %1447 = vmatpush1.bf16.msra.mxu0 0
        %1448 = vmatprep.subr.bf16.mxu0 0
        %1449 = vmatpush1.bf16.msra.mxu0 0
        %1450 = vmatprep.subr.bf16.mxu0 0
        %1451 = vmatpush1.bf16.msra.mxu0 0
        %1452 = vmatprep.subr.bf16.mxu0 0
        %1453 = vmatpush1.bf16.msra.mxu0 0
        %1454 = vmatprep.subr.bf16.mxu0 0
        %1455 = vmatpush1.bf16.msra.mxu0 0
        %1456 = vmatprep.subr.bf16.mxu0 0
        %1457 = vmatpush1.bf16.msra.mxu0 0
        %1458 = vmatprep.subr.bf16.mxu0 0
        %1459 = vmatpush1.bf16.msra.mxu0 0
        %1460 = vmatprep.mubr.bf16.mxu0 0
        %1461 = vmatmul.mubr.bf16.gmra.mrb[0].mxu0 %v609
        %v1462 = vpop.f32.mrb[0].mxu0
        %v1463 = vadd.f32 %v362, %v1462
        %v1464 = vpop.f32.mrb[0].mxu0
        %v1465 = vadd.f32 %v366, %v1464
        %v1466 = vpop.f32.mrb[0].mxu0
        %v1467 = vadd.f32 %v362, %v1466
        %v1468 = vpop.f32.mrb[0].mxu0
        %v1469 = vadd.f32 %v366, %v1468
        %1470 = vmatprep.mubr.bf16.mxu0 0
        %1471 = vmatmul.mubr.bf16.gmra.mrb[0].mxu0 %v612
        %v1472 = vpop.f32.mrb[0].mxu0
        %v1473 = vadd.f32 %v362, %v1472
        %v1474 = vpop.f32.mrb[0].mxu0
        %v1475 = vadd.f32 %v366, %v1474
        %v1476 = vpop.f32.mrb[0].mxu0
        %v1477 = vadd.f32 %v362, %v1476
        %v1478 = vpop.f32.mrb[0].mxu0
        %v1479 = vadd.f32 %v366, %v1478
        %1480 = vmatprep.mubr.bf16.mxu0 0
        %1481 = vmatmul.mubr.bf16.gmra.mrb[0].mxu0 %v615
        %v1482 = vpop.f32.mrb[0].mxu0
        %v1483 = vadd.f32 %v362, %v1482
        %v1484 = vpop.f32.mrb[0].mxu0
        %v1485 = vadd.f32 %v366, %v1484
        %v1486 = vpop.f32.mrb[0].mxu0
        %v1487 = vadd.f32 %v362, %v1486
        %v1488 = vpop.f32.mrb[0].mxu0
        %v1489 = vadd.f32 %v366, %v1488
        %1490 = vmatprep.mubr.bf16.mxu0 0
        %1491 = vmatmul.mubr.bf16.gmra.mrb[0].mxu0 %v618
        %v1492 = vpop.f32.mrb[0].mxu0
        %v1493 = vadd.f32 %v362, %v1492
        %v1494 = vpop.f32.mrb[0].mxu0
        %v1495 = vadd.f32 %v366, %v1494
        %v1496 = vpop.f32.mrb[0].mxu0
        %v1497 = vadd.f32 %v362, %v1496
        %v1498 = vpop.f32.mrb[0].mxu0
        %v1499 = vadd.f32 %v366, %v1498
        %1500 = vmatprep.mubr.bf16.mxu0 0
        %1501 = vmatmul.mubr.bf16.gmra.mrb[0].mxu0 %v621
        %v1502 = vpop.f32.mrb[0].mxu0
        %v1503 = vadd.f32 %v362, %v1502
        %v1504 = vpop.f32.mrb[0].mxu0
        %v1505 = vadd.f32 %v366, %v1504
        %v1506 = vpop.f32.mrb[0].mxu0
        %v1507 = vadd.f32 %v362, %v1506
        %v1508 = vpop.f32.mrb[0].mxu0
        %v1509 = vadd.f32 %v366, %v1508
        %1510 = vmatprep.mubr.bf16.mxu0 0
        %1511 = vmatmul.mubr.bf16.gmra.mrb[0].mxu0 %v624
        %v1512 = vpop.f32.mrb[0].mxu0
        %v1513 = vadd.f32 %v362, %v1512
        %v1514 = vpop.f32.mrb[0].mxu0
        %v1515 = vadd.f32 %v366, %v1514
        %v1516 = vpop.f32.mrb[0].mxu0
        %v1517 = vadd.f32 %v362, %v1516
        %v1518 = vpop.f32.mrb[0].mxu0
        %v1519 = vadd.f32 %v366, %v1518
        %1520 = vmatprep.mubr.bf16.mxu0 0
        %1521 = vmatmul.mubr.bf16.gmra.mrb[0].mxu0 %v627
        %v1522 = vpop.f32.mrb[0].mxu0
        %v1523 = vadd.f32 %v362, %v1522
        %v1524 = vpop.f32.mrb[0].mxu0
        %v1525 = vadd.f32 %v366, %v1524
        %v1526 = vpop.f32.mrb[0].mxu0
        %v1527 = vadd.f32 %v362, %v1526
        %v1528 = vpop.f32.mrb[0].mxu0
        %v1529 = vadd.f32 %v366, %v1528
        %1530 = vmatprep.mubr.bf16.mxu0 0
        %1531 = vmatmul.mubr.bf16.gmra.mrb[0].mxu0 %v630
        %v1532 = vpop.f32.mrb[0].mxu0
        %v1533 = vadd.f32 %v362, %v1532
        %v1534 = vpop.f32.mrb[0].mxu0
        %v1535 = vadd.f32 %v366, %v1534
        %v1536 = vpop.f32.mrb[0].mxu0
        %v1537 = vadd.f32 %v362, %v1536
        %v1538 = vpop.f32.mrb[0].mxu0
        %v1539 = vadd.f32 %v366, %v1538
        %1540 = vmatprep.mubr.bf16.mxu0 0
        %1541 = vmatmul.mubr.bf16.gmra.mrb[0].mxu0 %v633
        %v1542 = vpop.f32.mrb[0].mxu0
        %v1543 = vadd.f32 %v362, %v1542
        %v1544 = vpop.f32.mrb[0].mxu0
        %v1545 = vadd.f32 %v366, %v1544
        %v1546 = vpop.f32.mrb[0].mxu0
        %v1547 = vadd.f32 %v362, %v1546
        %v1548 = vpop.f32.mrb[0].mxu0
        %v1549 = vadd.f32 %v366, %v1548
        %1550 = vmatprep.mubr.bf16.mxu0 0
        %1551 = vmatmul.mubr.bf16.gmra.mrb[0].mxu0 %v636
        %v1552 = vpop.f32.mrb[0].mxu0
        %v1553 = vadd.f32 %v362, %v1552
        %v1554 = vpop.f32.mrb[0].mxu0
        %v1555 = vadd.f32 %v366, %v1554
        %v1556 = vpop.f32.mrb[0].mxu0
        %v1557 = vadd.f32 %v362, %v1556
        %v1558 = vpop.f32.mrb[0].mxu0
        %v1559 = vadd.f32 %v366, %v1558
        %1560 = vmatprep.mubr.bf16.mxu0 0
        %1561 = vmatmul.mubr.bf16.gmra.mrb[0].mxu0 %v639
        %v1562 = vpop.f32.mrb[0].mxu0
        %v1563 = vadd.f32 %v362, %v1562
        %v1564 = vpop.f32.mrb[0].mxu0
        %v1565 = vadd.f32 %v366, %v1564
        %v1566 = vpop.f32.mrb[0].mxu0
        %v1567 = vadd.f32 %v362, %v1566
        %v1568 = vpop.f32.mrb[0].mxu0
        %v1569 = vadd.f32 %v366, %v1568
        %1570 = vmatprep.mubr.bf16.mxu0 0
        %1571 = vmatmul.mubr.bf16.gmra.mrb[0].mxu0 %v642
        %v1572 = vpop.f32.mrb[0].mxu0
        %v1573 = vadd.f32 %v362, %v1572
        %v1574 = vpop.f32.mrb[0].mxu0
        %v1575 = vadd.f32 %v366, %v1574
        %v1576 = vpop.f32.mrb[0].mxu0
        %v1577 = vadd.f32 %v362, %v1576
        %v1578 = vpop.f32.mrb[0].mxu0
        %v1579 = vadd.f32 %v366, %v1578
        %1580 = vmatprep.mubr.bf16.mxu0 0
        %1581 = vmatmul.mubr.bf16.gmra.mrb[0].mxu0 %v645
        %v1582 = vpop.f32.mrb[0].mxu0
        %v1583 = vadd.f32 %v362, %v1582
        %v1584 = vpop.f32.mrb[0].mxu0
        %v1585 = vadd.f32 %v366, %v1584
        %v1586 = vpop.f32.mrb[0].mxu0
        %v1587 = vadd.f32 %v362, %v1586
        %v1588 = vpop.f32.mrb[0].mxu0
        %v1589 = vadd.f32 %v366, %v1588
        %1590 = vmatprep.mubr.bf16.mxu0 0
        %1591 = vmatmul.mubr.bf16.gmra.mrb[0].mxu0 %v648
        %v1592 = vpop.f32.mrb[0].mxu0
        %v1593 = vadd.f32 %v362, %v1592
        %v1594 = vpop.f32.mrb[0].mxu0
        %v1595 = vadd.f32 %v366, %v1594
        %v1596 = vpop.f32.mrb[0].mxu0
        %v1597 = vadd.f32 %v362, %v1596
        %v1598 = vpop.f32.mrb[0].mxu0
        %v1599 = vadd.f32 %v366, %v1598
        %1600 = vmatprep.mubr.bf16.mxu0 0
        %1601 = vmatmul.mubr.bf16.gmra.mrb[0].mxu0 %v651
        %v1602 = vpop.f32.mrb[0].mxu0
        %v1603 = vadd.f32 %v362, %v1602
        %v1604 = vpop.f32.mrb[0].mxu0
        %v1605 = vadd.f32 %v366, %v1604
        %v1606 = vpop.f32.mrb[0].mxu0
        %v1607 = vadd.f32 %v362, %v1606
        %v1608 = vpop.f32.mrb[0].mxu0
        %v1609 = vadd.f32 %v366, %v1608
        %1610 = vmatprep.mubr.bf16.mxu0 0
        %1611 = vmatmul.mubr.bf16.gmra.mrb[0].mxu0 %v654
        %v1612 = vpop.f32.mrb[0].mxu0
        %v1613 = vadd.f32 %v362, %v1612
        %v1614 = vpop.f32.mrb[0].mxu0
        %v1615 = vadd.f32 %v366, %v1614
        %v1616 = vpop.f32.mrb[0].mxu0
        %v1617 = vadd.f32 %v362, %v1616
        %v1618 = vpop.f32.mrb[0].mxu0
        %v1619 = vadd.f32 %v366, %v1618
        %1620 = vdwg.mxu0
        %v1621 = vmax.f32 %v691, 0.0
        %v1622 = vmax.f32 %v693, 0.0
        %v1623 = vmax.f32 %v884, 0.0
        %v1624 = vmax.f32 %v886, 0.0
        %v1625 = vmax.f32 %v1077, 0.0
        %v1626 = vmax.f32 %v1079, 0.0
        %v1627 = vmax.f32 %v1270, 0.0
        %v1628 = vmax.f32 %v1272, 0.0
        %v1629 = vmax.f32 %v1463, 0.0
        %v1630 = vmax.f32 %v1465, 0.0
        %v1631 = vmax.f32 %v695, 0.0
        %v1632 = vmax.f32 %v697, 0.0
        %v1633 = vmax.f32 %v888, 0.0
        %v1634 = vmax.f32 %v890, 0.0
        %v1635 = vmax.f32 %v1081, 0.0
        %v1636 = vmax.f32 %v1083, 0.0
        %v1637 = vmax.f32 %v1274, 0.0
        %v1638 = vmax.f32 %v1276, 0.0
        %v1639 = vmax.f32 %v1467, 0.0
        %v1640 = vmax.f32 %v1469, 0.0
        %v1641 = vmax.f32 %v701, 0.0
        %v1642 = vmax.f32 %v703, 0.0
        %v1643 = vmax.f32 %v894, 0.0
        %v1644 = vmax.f32 %v896, 0.0
        %v1645 = vmax.f32 %v1087, 0.0
        %v1646 = vmax.f32 %v1089, 0.0
        %v1647 = vmax.f32 %v1280, 0.0
        %v1648 = vmax.f32 %v1282, 0.0
        %v1649 = vmax.f32 %v1473, 0.0
        %v1650 = vmax.f32 %v1475, 0.0
        %v1651 = vmax.f32 %v705, 0.0
        %v1652 = vmax.f32 %v707, 0.0
        %v1653 = vmax.f32 %v898, 0.0
        %v1654 = vmax.f32 %v900, 0.0
        %v1655 = vmax.f32 %v1091, 0.0
        %v1656 = vmax.f32 %v1093, 0.0
        %v1657 = vmax.f32 %v1284, 0.0
        %v1658 = vmax.f32 %v1286, 0.0
        %v1659 = vmax.f32 %v1477, 0.0
        %v1660 = vmax.f32 %v1479, 0.0
        %v1661 = vmax.f32 %v711, 0.0
        %v1662 = vmax.f32 %v713, 0.0
        %v1663 = vmax.f32 %v904, 0.0
        %v1664 = vmax.f32 %v906, 0.0
        %v1665 = vmax.f32 %v1097, 0.0
        %v1666 = vmax.f32 %v1099, 0.0
        %v1667 = vmax.f32 %v1290, 0.0
        %v1668 = vmax.f32 %v1292, 0.0
        %v1669 = vmax.f32 %v1483, 0.0
        %v1670 = vmax.f32 %v1485, 0.0
        %v1671 = vmax.f32 %v715, 0.0
        %v1672 = vmax.f32 %v717, 0.0
        %v1673 = vmax.f32 %v908, 0.0
        %v1674 = vmax.f32 %v910, 0.0
        %v1675 = vmax.f32 %v1101, 0.0
        %v1676 = vmax.f32 %v1103, 0.0
        %v1677 = vmax.f32 %v1294, 0.0
        %v1678 = vmax.f32 %v1296, 0.0
        %v1679 = vmax.f32 %v1487, 0.0
        %v1680 = vmax.f32 %v1489, 0.0
        %v1681 = vmax.f32 %v721, 0.0
        %v1682 = vmax.f32 %v723, 0.0
        %v1683 = vmax.f32 %v914, 0.0
        %v1684 = vmax.f32 %v916, 0.0
        %v1685 = vmax.f32 %v1107, 0.0
        %v1686 = vmax.f32 %v1109, 0.0
        %v1687 = vmax.f32 %v1300, 0.0
        %v1688 = vmax.f32 %v1302, 0.0
        %v1689 = vmax.f32 %v1493, 0.0
        %v1690 = vmax.f32 %v1495, 0.0
        %v1691 = vmax.f32 %v725, 0.0
        %v1692 = vmax.f32 %v727, 0.0
        %v1693 = vmax.f32 %v918, 0.0
        %v1694 = vmax.f32 %v920, 0.0
        %v1695 = vmax.f32 %v1111, 0.0
        %v1696 = vmax.f32 %v1113, 0.0
        %v1697 = vmax.f32 %v1304, 0.0
        %v1698 = vmax.f32 %v1306, 0.0
        %v1699 = vmax.f32 %v1497, 0.0
        %v1700 = vmax.f32 %v1499, 0.0
        %v1701 = vmax.f32 %v731, 0.0
        %v1702 = vmax.f32 %v733, 0.0
        %v1703 = vmax.f32 %v924, 0.0
        %v1704 = vmax.f32 %v926, 0.0
        %v1705 = vmax.f32 %v1117, 0.0
        %v1706 = vmax.f32 %v1119, 0.0
        %v1707 = vmax.f32 %v1310, 0.0
        %v1708 = vmax.f32 %v1312, 0.0
        %v1709 = vmax.f32 %v1503, 0.0
        %v1710 = vmax.f32 %v1505, 0.0
        %v1711 = vmax.f32 %v735, 0.0
        %v1712 = vmax.f32 %v737, 0.0
        %v1713 = vmax.f32 %v928, 0.0
        %v1714 = vmax.f32 %v930, 0.0
        %v1715 = vmax.f32 %v1121, 0.0
        %v1716 = vmax.f32 %v1123, 0.0
        %v1717 = vmax.f32 %v1314, 0.0
        %v1718 = vmax.f32 %v1316, 0.0
        %v1719 = vmax.f32 %v1507, 0.0
        %v1720 = vmax.f32 %v1509, 0.0
        %v1721 = vmax.f32 %v741, 0.0
        %v1722 = vmax.f32 %v743, 0.0
        %v1723 = vmax.f32 %v934, 0.0
        %v1724 = vmax.f32 %v936, 0.0
        %v1725 = vmax.f32 %v1127, 0.0
        %v1726 = vmax.f32 %v1129, 0.0
        %v1727 = vmax.f32 %v1320, 0.0
        %v1728 = vmax.f32 %v1322, 0.0
        %v1729 = vmax.f32 %v1513, 0.0
        %v1730 = vmax.f32 %v1515, 0.0
        %v1731 = vmax.f32 %v745, 0.0
        %v1732 = vmax.f32 %v747, 0.0
        %v1733 = vmax.f32 %v938, 0.0
        %v1734 = vmax.f32 %v940, 0.0
        %v1735 = vmax.f32 %v1131, 0.0
        %v1736 = vmax.f32 %v1133, 0.0
        %v1737 = vmax.f32 %v1324, 0.0
        %v1738 = vmax.f32 %v1326, 0.0
        %v1739 = vmax.f32 %v1517, 0.0
        %v1740 = vmax.f32 %v1519, 0.0
        %v1741 = vmax.f32 %v751, 0.0
        %v1742 = vmax.f32 %v753, 0.0
        %v1743 = vmax.f32 %v944, 0.0
        %v1744 = vmax.f32 %v946, 0.0
        %v1745 = vmax.f32 %v1137, 0.0
        %v1746 = vmax.f32 %v1139, 0.0
        %v1747 = vmax.f32 %v1330, 0.0
        %v1748 = vmax.f32 %v1332, 0.0
        %v1749 = vmax.f32 %v1523, 0.0
        %v1750 = vmax.f32 %v1525, 0.0
        %v1751 = vmax.f32 %v755, 0.0
        %v1752 = vmax.f32 %v757, 0.0
        %v1753 = vmax.f32 %v948, 0.0
        %v1754 = vmax.f32 %v950, 0.0
        %v1755 = vmax.f32 %v1141, 0.0
        %v1756 = vmax.f32 %v1143, 0.0
        %v1757 = vmax.f32 %v1334, 0.0
        %v1758 = vmax.f32 %v1336, 0.0
        %v1759 = vmax.f32 %v1527, 0.0
        %v1760 = vmax.f32 %v1529, 0.0
        %v1761 = vmax.f32 %v761, 0.0
        %v1762 = vmax.f32 %v763, 0.0
        %v1763 = vmax.f32 %v954, 0.0
        %v1764 = vmax.f32 %v956, 0.0
        %v1765 = vmax.f32 %v1147, 0.0
        %v1766 = vmax.f32 %v1149, 0.0
        %v1767 = vmax.f32 %v1340, 0.0
        %v1768 = vmax.f32 %v1342, 0.0
        %v1769 = vmax.f32 %v1533, 0.0
        %v1770 = vmax.f32 %v1535, 0.0
        %v1771 = vmax.f32 %v765, 0.0
        %v1772 = vmax.f32 %v767, 0.0
        %v1773 = vmax.f32 %v958, 0.0
        %v1774 = vmax.f32 %v960, 0.0
        %v1775 = vmax.f32 %v1151, 0.0
        %v1776 = vmax.f32 %v1153, 0.0
        %v1777 = vmax.f32 %v1344, 0.0
        %v1778 = vmax.f32 %v1346, 0.0
        %v1779 = vmax.f32 %v1537, 0.0
        %v1780 = vmax.f32 %v1539, 0.0
        %v1781 = vmax.f32 %v771, 0.0
        %v1782 = vmax.f32 %v773, 0.0
        %v1783 = vmax.f32 %v964, 0.0
        %v1784 = vmax.f32 %v966, 0.0
        %v1785 = vmax.f32 %v1157, 0.0
        %v1786 = vmax.f32 %v1159, 0.0
        %v1787 = vmax.f32 %v1350, 0.0
        %v1788 = vmax.f32 %v1352, 0.0
        %v1789 = vmax.f32 %v1543, 0.0
        %v1790 = vmax.f32 %v1545, 0.0
        %v1791 = vmax.f32 %v775, 0.0
        %v1792 = vmax.f32 %v777, 0.0
        %v1793 = vmax.f32 %v968, 0.0
        %v1794 = vmax.f32 %v970, 0.0
        %v1795 = vmax.f32 %v1161, 0.0
        %v1796 = vmax.f32 %v1163, 0.0
        %v1797 = vmax.f32 %v1354, 0.0
        %v1798 = vmax.f32 %v1356, 0.0
        %v1799 = vmax.f32 %v1547, 0.0
        %v1800 = vmax.f32 %v1549, 0.0
        %v1801 = vmax.f32 %v781, 0.0
        %v1802 = vmax.f32 %v783, 0.0
        %v1803 = vmax.f32 %v974, 0.0
        %v1804 = vmax.f32 %v976, 0.0
        %v1805 = vmax.f32 %v1167, 0.0
        %v1806 = vmax.f32 %v1169, 0.0
        %v1807 = vmax.f32 %v1360, 0.0
        %v1808 = vmax.f32 %v1362, 0.0
        %v1809 = vmax.f32 %v1553, 0.0
        %v1810 = vmax.f32 %v1555, 0.0
        %v1811 = vmax.f32 %v785, 0.0
        %v1812 = vmax.f32 %v787, 0.0
        %v1813 = vmax.f32 %v978, 0.0
        %v1814 = vmax.f32 %v980, 0.0
        %v1815 = vmax.f32 %v1171, 0.0
        %v1816 = vmax.f32 %v1173, 0.0
        %v1817 = vmax.f32 %v1364, 0.0
        %v1818 = vmax.f32 %v1366, 0.0
        %v1819 = vmax.f32 %v1557, 0.0
        %v1820 = vmax.f32 %v1559, 0.0
        %v1821 = vmax.f32 %v791, 0.0
        %v1822 = vmax.f32 %v793, 0.0
        %v1823 = vmax.f32 %v984, 0.0
        %v1824 = vmax.f32 %v986, 0.0
        %v1825 = vmax.f32 %v1177, 0.0
        %v1826 = vmax.f32 %v1179, 0.0
        %v1827 = vmax.f32 %v1370, 0.0
        %v1828 = vmax.f32 %v1372, 0.0
        %v1829 = vmax.f32 %v1563, 0.0
        %v1830 = vmax.f32 %v1565, 0.0
        %v1831 = vmax.f32 %v795, 0.0
        %v1832 = vmax.f32 %v797, 0.0
        %v1833 = vmax.f32 %v988, 0.0
        %v1834 = vmax.f32 %v990, 0.0
        %v1835 = vmax.f32 %v1181, 0.0
        %v1836 = vmax.f32 %v1183, 0.0
        %v1837 = vmax.f32 %v1374, 0.0
        %v1838 = vmax.f32 %v1376, 0.0
        %v1839 = vmax.f32 %v1567, 0.0
        %v1840 = vmax.f32 %v1569, 0.0
        %v1841 = vmax.f32 %v801, 0.0
        %v1842 = vmax.f32 %v803, 0.0
        %v1843 = vmax.f32 %v994, 0.0
        %v1844 = vmax.f32 %v996, 0.0
        %v1845 = vmax.f32 %v1187, 0.0
        %v1846 = vmax.f32 %v1189, 0.0
        %v1847 = vmax.f32 %v1380, 0.0
        %v1848 = vmax.f32 %v1382, 0.0
        %v1849 = vmax.f32 %v1573, 0.0
        %v1850 = vmax.f32 %v1575, 0.0
        %v1851 = vmax.f32 %v805, 0.0
        %v1852 = vmax.f32 %v807, 0.0
        %v1853 = vmax.f32 %v998, 0.0
        %v1854 = vmax.f32 %v1000, 0.0
        %v1855 = vmax.f32 %v1191, 0.0
        %v1856 = vmax.f32 %v1193, 0.0
        %v1857 = vmax.f32 %v1384, 0.0
        %v1858 = vmax.f32 %v1386, 0.0
        %v1859 = vmax.f32 %v1577, 0.0
        %v1860 = vmax.f32 %v1579, 0.0
        %v1861 = vmax.f32 %v811, 0.0
        %v1862 = vmax.f32 %v813, 0.0
        %v1863 = vmax.f32 %v1004, 0.0
        %v1864 = vmax.f32 %v1006, 0.0
        %v1865 = vmax.f32 %v1197, 0.0
        %v1866 = vmax.f32 %v1199, 0.0
        %v1867 = vmax.f32 %v1390, 0.0
        %v1868 = vmax.f32 %v1392, 0.0
        %v1869 = vmax.f32 %v1583, 0.0
        %v1870 = vmax.f32 %v1585, 0.0
        %v1871 = vmax.f32 %v815, 0.0
        %v1872 = vmax.f32 %v817, 0.0
        %v1873 = vmax.f32 %v1008, 0.0
        %v1874 = vmax.f32 %v1010, 0.0
        %v1875 = vmax.f32 %v1201, 0.0
        %v1876 = vmax.f32 %v1203, 0.0
        %v1877 = vmax.f32 %v1394, 0.0
        %v1878 = vmax.f32 %v1396, 0.0
        %v1879 = vmax.f32 %v1587, 0.0
        %v1880 = vmax.f32 %v1589, 0.0
        %v1881 = vmax.f32 %v821, 0.0
        %v1882 = vmax.f32 %v823, 0.0
        %v1883 = vmax.f32 %v1014, 0.0
        %v1884 = vmax.f32 %v1016, 0.0
        %v1885 = vmax.f32 %v1207, 0.0
        %v1886 = vmax.f32 %v1209, 0.0
        %v1887 = vmax.f32 %v1400, 0.0
        %v1888 = vmax.f32 %v1402, 0.0
        %v1889 = vmax.f32 %v1593, 0.0
        %v1890 = vmax.f32 %v1595, 0.0
        %v1891 = vmax.f32 %v825, 0.0
        %v1892 = vmax.f32 %v827, 0.0
        %v1893 = vmax.f32 %v1018, 0.0
        %v1894 = vmax.f32 %v1020, 0.0
        %v1895 = vmax.f32 %v1211, 0.0
        %v1896 = vmax.f32 %v1213, 0.0
        %v1897 = vmax.f32 %v1404, 0.0
        %v1898 = vmax.f32 %v1406, 0.0
        %v1899 = vmax.f32 %v1597, 0.0
        %v1900 = vmax.f32 %v1599, 0.0
        %v1901 = vmax.f32 %v831, 0.0
        %v1902 = vmax.f32 %v833, 0.0
        %v1903 = vmax.f32 %v1024, 0.0
        %v1904 = vmax.f32 %v1026, 0.0
        %v1905 = vmax.f32 %v1217, 0.0
        %v1906 = vmax.f32 %v1219, 0.0
        %v1907 = vmax.f32 %v1410, 0.0
        %v1908 = vmax.f32 %v1412, 0.0
        %v1909 = vmax.f32 %v1603, 0.0
        %v1910 = vmax.f32 %v1605, 0.0
        %v1911 = vmax.f32 %v835, 0.0
        %v1912 = vmax.f32 %v837, 0.0
        %v1913 = vmax.f32 %v1028, 0.0
        %v1914 = vmax.f32 %v1030, 0.0
        %v1915 = vmax.f32 %v1221, 0.0
        %v1916 = vmax.f32 %v1223, 0.0
        %v1917 = vmax.f32 %v1414, 0.0
        %v1918 = vmax.f32 %v1416, 0.0
        %v1919 = vmax.f32 %v1607, 0.0
        %v1920 = vmax.f32 %v1609, 0.0
        %v1921 = vmax.f32 %v841, 0.0
        %v1922 = vmax.f32 %v843, 0.0
        %v1923 = vmax.f32 %v1034, 0.0
        %v1924 = vmax.f32 %v1036, 0.0
        %v1925 = vmax.f32 %v1227, 0.0
        %v1926 = vmax.f32 %v1229, 0.0
        %v1927 = vmax.f32 %v1420, 0.0
        %v1928 = vmax.f32 %v1422, 0.0
        %v1929 = vmax.f32 %v1613, 0.0
        %v1930 = vmax.f32 %v1615, 0.0
        %v1931 = vmax.f32 %v845, 0.0
        %v1932 = vmax.f32 %v847, 0.0
        %v1933 = vmax.f32 %v1038, 0.0
        %v1934 = vmax.f32 %v1040, 0.0
        %v1935 = vmax.f32 %v1231, 0.0
        %v1936 = vmax.f32 %v1233, 0.0
        %v1937 = vmax.f32 %v1424, 0.0
        %v1938 = vmax.f32 %v1426, 0.0
        %v1939 = vmax.f32 %v1617, 0.0
        %v1940 = vmax.f32 %v1619, 0.0
        %v1941 = vld [vmem:[#allocation2] sm:$0xff]
        %v1942 = vld [vmem:[#allocation2 + $0x8] sm:$0x3]
        %v1943 = vadd.f32 %v1621, %v1631
        %v1944 = vadd.f32 %v1943, %v1641
        %v1945 = vadd.f32 %v1944, %v1651
        %v1946 = vadd.f32 %v1945, %v1661
        %v1947 = vadd.f32 %v1946, %v1671
        %v1948 = vadd.f32 %v1947, %v1681
        %v1949 = vadd.f32 %v1948, %v1691
        %v1950 = vadd.f32 %v1949, %v1701
        %v1951 = vadd.f32 %v1950, %v1711
        %v1952 = vadd.f32 %v1951, %v1721
        %v1953 = vadd.f32 %v1952, %v1731
        %v1954 = vadd.f32 %v1953, %v1741
        %v1955 = vadd.f32 %v1954, %v1751
        %v1956 = vadd.f32 %v1955, %v1761
        %v1957 = vadd.f32 %v1956, %v1771
        %v1958 = vadd.f32 %v1957, %v1781
        %v1959 = vadd.f32 %v1958, %v1791
        %v1960 = vadd.f32 %v1959, %v1801
        %v1961 = vadd.f32 %v1960, %v1811
        %v1962 = vadd.f32 %v1961, %v1821
        %v1963 = vadd.f32 %v1962, %v1831
        %v1964 = vadd.f32 %v1963, %v1841
        %v1965 = vadd.f32 %v1964, %v1851
        %v1966 = vadd.f32 %v1965, %v1861
        %v1967 = vadd.f32 %v1966, %v1871
        %v1968 = vadd.f32 %v1967, %v1881
        %v1969 = vadd.f32 %v1968, %v1891
        %v1970 = vadd.f32 %v1969, %v1901
        %v1971 = vadd.f32 %v1970, %v1911
        %v1972 = vadd.f32 %v1971, %v1921
        %v1973 = vadd.f32 %v1972, %v1931
        %v1974 = vrot.slane %v1973, 4
        %v1975 = vadd.f32 %v1973, %v1974
        %v1976 = vrot.slane %v1975, 2
        %v1977 = vadd.f32 %v1975, %v1976
        %v1978 = vrot.slane %v1977, 1
        %v1979 = vadd.f32 %v1977, %v1978
        %v1980 = vadd.f32 %v1622, %v1632
        %v1981 = vadd.f32 %v1980, %v1642
        %v1982 = vadd.f32 %v1981, %v1652
        %v1983 = vadd.f32 %v1982, %v1662
        %v1984 = vadd.f32 %v1983, %v1672
        %v1985 = vadd.f32 %v1984, %v1682
        %v1986 = vadd.f32 %v1985, %v1692
        %v1987 = vadd.f32 %v1986, %v1702
        %v1988 = vadd.f32 %v1987, %v1712
        %v1989 = vadd.f32 %v1988, %v1722
        %v1990 = vadd.f32 %v1989, %v1732
        %v1991 = vadd.f32 %v1990, %v1742
        %v1992 = vadd.f32 %v1991, %v1752
        %v1993 = vadd.f32 %v1992, %v1762
        %v1994 = vadd.f32 %v1993, %v1772
        %v1995 = vadd.f32 %v1994, %v1782
        %v1996 = vadd.f32 %v1995, %v1792
        %v1997 = vadd.f32 %v1996, %v1802
        %v1998 = vadd.f32 %v1997, %v1812
        %v1999 = vadd.f32 %v1998, %v1822
        %v2000 = vadd.f32 %v1999, %v1832
        %v2001 = vadd.f32 %v2000, %v1842
        %v2002 = vadd.f32 %v2001, %v1852
        %v2003 = vadd.f32 %v2002, %v1862
        %v2004 = vadd.f32 %v2003, %v1872
        %v2005 = vadd.f32 %v2004, %v1882
        %v2006 = vadd.f32 %v2005, %v1892
        %v2007 = vadd.f32 %v2006, %v1902
        %v2008 = vadd.f32 %v2007, %v1912
        %v2009 = vadd.f32 %v2008, %v1922
        %v2010 = vadd.f32 %v2009, %v1932
        %v2011 = vrot.slane %v2010, 4
        %v2012 = vadd.f32 %v2010, %v2011
        %v2013 = vrot.slane %v2012, 2
        %v2014 = vadd.f32 %v2012, %v2013
        %v2015 = vrot.slane %v2014, 1
        %v2016 = vadd.f32 %v2014, %v2015
        %v2017 = vadd.f32 %v1623, %v1633
        %v2018 = vadd.f32 %v2017, %v1643
        %v2019 = vadd.f32 %v2018, %v1653
        %v2020 = vadd.f32 %v2019, %v1663
        %v2021 = vadd.f32 %v2020, %v1673
        %v2022 = vadd.f32 %v2021, %v1683
        %v2023 = vadd.f32 %v2022, %v1693
        %v2024 = vadd.f32 %v2023, %v1703
        %v2025 = vadd.f32 %v2024, %v1713
        %v2026 = vadd.f32 %v2025, %v1723
        %v2027 = vadd.f32 %v2026, %v1733
        %v2028 = vadd.f32 %v2027, %v1743
        %v2029 = vadd.f32 %v2028, %v1753
        %v2030 = vadd.f32 %v2029, %v1763
        %v2031 = vadd.f32 %v2030, %v1773
        %v2032 = vadd.f32 %v2031, %v1783
        %v2033 = vadd.f32 %v2032, %v1793
        %v2034 = vadd.f32 %v2033, %v1803
        %v2035 = vadd.f32 %v2034, %v1813
        %v2036 = vadd.f32 %v2035, %v1823
        %v2037 = vadd.f32 %v2036, %v1833
        %v2038 = vadd.f32 %v2037, %v1843
        %v2039 = vadd.f32 %v2038, %v1853
        %v2040 = vadd.f32 %v2039, %v1863
        %v2041 = vadd.f32 %v2040, %v1873
        %v2042 = vadd.f32 %v2041, %v1883
        %v2043 = vadd.f32 %v2042, %v1893
        %v2044 = vadd.f32 %v2043, %v1903
        %v2045 = vadd.f32 %v2044, %v1913
        %v2046 = vadd.f32 %v2045, %v1923
        %v2047 = vadd.f32 %v2046, %v1933
        %v2048 = vrot.slane %v2047, 4
        %v2049 = vadd.f32 %v2047, %v2048
        %v2050 = vrot.slane %v2049, 2
        %v2051 = vadd.f32 %v2049, %v2050
        %v2052 = vrot.slane %v2051, 1
        %v2053 = vadd.f32 %v2051, %v2052
        %v2054 = vadd.f32 %v1624, %v1634
        %v2055 = vadd.f32 %v2054, %v1644
        %v2056 = vadd.f32 %v2055, %v1654
        %v2057 = vadd.f32 %v2056, %v1664
        %v2058 = vadd.f32 %v2057, %v1674
        %v2059 = vadd.f32 %v2058, %v1684
        %v2060 = vadd.f32 %v2059, %v1694
        %v2061 = vadd.f32 %v2060, %v1704
        %v2062 = vadd.f32 %v2061, %v1714
        %v2063 = vadd.f32 %v2062, %v1724
        %v2064 = vadd.f32 %v2063, %v1734
        %v2065 = vadd.f32 %v2064, %v1744
        %v2066 = vadd.f32 %v2065, %v1754
        %v2067 = vadd.f32 %v2066, %v1764
        %v2068 = vadd.f32 %v2067, %v1774
        %v2069 = vadd.f32 %v2068, %v1784
        %v2070 = vadd.f32 %v2069, %v1794
        %v2071 = vadd.f32 %v2070, %v1804
        %v2072 = vadd.f32 %v2071, %v1814
        %v2073 = vadd.f32 %v2072, %v1824
        %v2074 = vadd.f32 %v2073, %v1834
        %v2075 = vadd.f32 %v2074, %v1844
        %v2076 = vadd.f32 %v2075, %v1854
        %v2077 = vadd.f32 %v2076, %v1864
        %v2078 = vadd.f32 %v2077, %v1874
        %v2079 = vadd.f32 %v2078, %v1884
        %v2080 = vadd.f32 %v2079, %v1894
        %v2081 = vadd.f32 %v2080, %v1904
        %v2082 = vadd.f32 %v2081, %v1914
        %v2083 = vadd.f32 %v2082, %v1924
        %v2084 = vadd.f32 %v2083, %v1934
        %v2085 = vrot.slane %v2084, 4
        %v2086 = vadd.f32 %v2084, %v2085
        %v2087 = vrot.slane %v2086, 2
        %v2088 = vadd.f32 %v2086, %v2087
        %v2089 = vrot.slane %v2088, 1
        %v2090 = vadd.f32 %v2088, %v2089
        %v2091 = vadd.f32 %v1625, %v1635
        %v2092 = vadd.f32 %v2091, %v1645
        %v2093 = vadd.f32 %v2092, %v1655
        %v2094 = vadd.f32 %v2093, %v1665
        %v2095 = vadd.f32 %v2094, %v1675
        %v2096 = vadd.f32 %v2095, %v1685
        %v2097 = vadd.f32 %v2096, %v1695
        %v2098 = vadd.f32 %v2097, %v1705
        %v2099 = vadd.f32 %v2098, %v1715
        %v2100 = vadd.f32 %v2099, %v1725
        %v2101 = vadd.f32 %v2100, %v1735
        %v2102 = vadd.f32 %v2101, %v1745
        %v2103 = vadd.f32 %v2102, %v1755
        %v2104 = vadd.f32 %v2103, %v1765
        %v2105 = vadd.f32 %v2104, %v1775
        %v2106 = vadd.f32 %v2105, %v1785
        %v2107 = vadd.f32 %v2106, %v1795
        %v2108 = vadd.f32 %v2107, %v1805
        %v2109 = vadd.f32 %v2108, %v1815
        %v2110 = vadd.f32 %v2109, %v1825
        %v2111 = vadd.f32 %v2110, %v1835
        %v2112 = vadd.f32 %v2111, %v1845
        %v2113 = vadd.f32 %v2112, %v1855
        %v2114 = vadd.f32 %v2113, %v1865
        %v2115 = vadd.f32 %v2114, %v1875
        %v2116 = vadd.f32 %v2115, %v1885
        %v2117 = vadd.f32 %v2116, %v1895
        %v2118 = vadd.f32 %v2117, %v1905
        %v2119 = vadd.f32 %v2118, %v1915
        %v2120 = vadd.f32 %v2119, %v1925
        %v2121 = vadd.f32 %v2120, %v1935
        %v2122 = vrot.slane %v2121, 4
        %v2123 = vadd.f32 %v2121, %v2122
        %v2124 = vrot.slane %v2123, 2
        %v2125 = vadd.f32 %v2123, %v2124
        %v2126 = vrot.slane %v2125, 1
        %v2127 = vadd.f32 %v2125, %v2126
        %v2128 = vadd.f32 %v1626, %v1636
        %v2129 = vadd.f32 %v2128, %v1646
        %v2130 = vadd.f32 %v2129, %v1656
        %v2131 = vadd.f32 %v2130, %v1666
        %v2132 = vadd.f32 %v2131, %v1676
        %v2133 = vadd.f32 %v2132, %v1686
        %v2134 = vadd.f32 %v2133, %v1696
        %v2135 = vadd.f32 %v2134, %v1706
        %v2136 = vadd.f32 %v2135, %v1716
        %v2137 = vadd.f32 %v2136, %v1726
        %v2138 = vadd.f32 %v2137, %v1736
        %v2139 = vadd.f32 %v2138, %v1746
        %v2140 = vadd.f32 %v2139, %v1756
        %v2141 = vadd.f32 %v2140, %v1766
        %v2142 = vadd.f32 %v2141, %v1776
        %v2143 = vadd.f32 %v2142, %v1786
        %v2144 = vadd.f32 %v2143, %v1796
        %v2145 = vadd.f32 %v2144, %v1806
        %v2146 = vadd.f32 %v2145, %v1816
        %v2147 = vadd.f32 %v2146, %v1826
        %v2148 = vadd.f32 %v2147, %v1836
        %v2149 = vadd.f32 %v2148, %v1846
        %v2150 = vadd.f32 %v2149, %v1856
        %v2151 = vadd.f32 %v2150, %v1866
        %v2152 = vadd.f32 %v2151, %v1876
        %v2153 = vadd.f32 %v2152, %v1886
        %v2154 = vadd.f32 %v2153, %v1896
        %v2155 = vadd.f32 %v2154, %v1906
        %v2156 = vadd.f32 %v2155, %v1916
        %v2157 = vadd.f32 %v2156, %v1926
        %v2158 = vadd.f32 %v2157, %v1936
        %v2159 = vrot.slane %v2158, 4
        %v2160 = vadd.f32 %v2158, %v2159
        %v2161 = vrot.slane %v2160, 2
        %v2162 = vadd.f32 %v2160, %v2161
        %v2163 = vrot.slane %v2162, 1
        %v2164 = vadd.f32 %v2162, %v2163
        %v2165 = vadd.f32 %v1627, %v1637
        %v2166 = vadd.f32 %v2165, %v1647
        %v2167 = vadd.f32 %v2166, %v1657
        %v2168 = vadd.f32 %v2167, %v1667
        %v2169 = vadd.f32 %v2168, %v1677
        %v2170 = vadd.f32 %v2169, %v1687
        %v2171 = vadd.f32 %v2170, %v1697
        %v2172 = vadd.f32 %v2171, %v1707
        %v2173 = vadd.f32 %v2172, %v1717
        %v2174 = vadd.f32 %v2173, %v1727
        %v2175 = vadd.f32 %v2174, %v1737
        %v2176 = vadd.f32 %v2175, %v1747
        %v2177 = vadd.f32 %v2176, %v1757
        %v2178 = vadd.f32 %v2177, %v1767
        %v2179 = vadd.f32 %v2178, %v1777
        %v2180 = vadd.f32 %v2179, %v1787
        %v2181 = vadd.f32 %v2180, %v1797
        %v2182 = vadd.f32 %v2181, %v1807
        %v2183 = vadd.f32 %v2182, %v1817
        %v2184 = vadd.f32 %v2183, %v1827
        %v2185 = vadd.f32 %v2184, %v1837
        %v2186 = vadd.f32 %v2185, %v1847
        %v2187 = vadd.f32 %v2186, %v1857
        %v2188 = vadd.f32 %v2187, %v1867
        %v2189 = vadd.f32 %v2188, %v1877
        %v2190 = vadd.f32 %v2189, %v1887
        %v2191 = vadd.f32 %v2190, %v1897
        %v2192 = vadd.f32 %v2191, %v1907
        %v2193 = vadd.f32 %v2192, %v1917
        %v2194 = vadd.f32 %v2193, %v1927
        %v2195 = vadd.f32 %v2194, %v1937
        %v2196 = vrot.slane %v2195, 4
        %v2197 = vadd.f32 %v2195, %v2196
        %v2198 = vrot.slane %v2197, 2
        %v2199 = vadd.f32 %v2197, %v2198
        %v2200 = vrot.slane %v2199, 1
        %v2201 = vadd.f32 %v2199, %v2200
        %v2202 = vadd.f32 %v1628, %v1638
        %v2203 = vadd.f32 %v2202, %v1648
        %v2204 = vadd.f32 %v2203, %v1658
        %v2205 = vadd.f32 %v2204, %v1668
        %v2206 = vadd.f32 %v2205, %v1678
        %v2207 = vadd.f32 %v2206, %v1688
        %v2208 = vadd.f32 %v2207, %v1698
        %v2209 = vadd.f32 %v2208, %v1708
        %v2210 = vadd.f32 %v2209, %v1718
        %v2211 = vadd.f32 %v2210, %v1728
        %v2212 = vadd.f32 %v2211, %v1738
        %v2213 = vadd.f32 %v2212, %v1748
        %v2214 = vadd.f32 %v2213, %v1758
        %v2215 = vadd.f32 %v2214, %v1768
        %v2216 = vadd.f32 %v2215, %v1778
        %v2217 = vadd.f32 %v2216, %v1788
        %v2218 = vadd.f32 %v2217, %v1798
        %v2219 = vadd.f32 %v2218, %v1808
        %v2220 = vadd.f32 %v2219, %v1818
        %v2221 = vadd.f32 %v2220, %v1828
        %v2222 = vadd.f32 %v2221, %v1838
        %v2223 = vadd.f32 %v2222, %v1848
        %v2224 = vadd.f32 %v2223, %v1858
        %v2225 = vadd.f32 %v2224, %v1868
        %v2226 = vadd.f32 %v2225, %v1878
        %v2227 = vadd.f32 %v2226, %v1888
        %v2228 = vadd.f32 %v2227, %v1898
        %v2229 = vadd.f32 %v2228, %v1908
        %v2230 = vadd.f32 %v2229, %v1918
        %v2231 = vadd.f32 %v2230, %v1928
        %v2232 = vadd.f32 %v2231, %v1938
        %v2233 = vrot.slane %v2232, 4
        %v2234 = vadd.f32 %v2232, %v2233
        %v2235 = vrot.slane %v2234, 2
        %v2236 = vadd.f32 %v2234, %v2235
        %v2237 = vrot.slane %v2236, 1
        %v2238 = vadd.f32 %v2236, %v2237
        %v2239 = vadd.f32 %v1629, %v1639
        %v2240 = vadd.f32 %v2239, %v1649
        %v2241 = vadd.f32 %v2240, %v1659
        %v2242 = vadd.f32 %v2241, %v1669
        %v2243 = vadd.f32 %v2242, %v1679
        %v2244 = vadd.f32 %v2243, %v1689
        %v2245 = vadd.f32 %v2244, %v1699
        %v2246 = vadd.f32 %v2245, %v1709
        %v2247 = vadd.f32 %v2246, %v1719
        %v2248 = vadd.f32 %v2247, %v1729
        %v2249 = vadd.f32 %v2248, %v1739
        %v2250 = vadd.f32 %v2249, %v1749
        %v2251 = vadd.f32 %v2250, %v1759
        %v2252 = vadd.f32 %v2251, %v1769
        %v2253 = vadd.f32 %v2252, %v1779
        %v2254 = vadd.f32 %v2253, %v1789
        %v2255 = vadd.f32 %v2254, %v1799
        %v2256 = vadd.f32 %v2255, %v1809
        %v2257 = vadd.f32 %v2256, %v1819
        %v2258 = vadd.f32 %v2257, %v1829
        %v2259 = vadd.f32 %v2258, %v1839
        %v2260 = vadd.f32 %v2259, %v1849
        %v2261 = vadd.f32 %v2260, %v1859
        %v2262 = vadd.f32 %v2261, %v1869
        %v2263 = vadd.f32 %v2262, %v1879
        %v2264 = vadd.f32 %v2263, %v1889
        %v2265 = vadd.f32 %v2264, %v1899
        %v2266 = vadd.f32 %v2265, %v1909
        %v2267 = vadd.f32 %v2266, %v1919
        %v2268 = vadd.f32 %v2267, %v1929
        %v2269 = vadd.f32 %v2268, %v1939
        %v2270 = vrot.slane %v2269, 4
        %v2271 = vadd.f32 %v2269, %v2270
        %v2272 = vrot.slane %v2271, 2
        %v2273 = vadd.f32 %v2271, %v2272
        %v2274 = vrot.slane %v2273, 1
        %v2275 = vadd.f32 %v2273, %v2274
        %v2276 = vadd.f32 %v1630, %v1640
        %v2277 = vadd.f32 %v2276, %v1650
        %v2278 = vadd.f32 %v2277, %v1660
        %v2279 = vadd.f32 %v2278, %v1670
        %v2280 = vadd.f32 %v2279, %v1680
        %v2281 = vadd.f32 %v2280, %v1690
        %v2282 = vadd.f32 %v2281, %v1700
        %v2283 = vadd.f32 %v2282, %v1710
        %v2284 = vadd.f32 %v2283, %v1720
        %v2285 = vadd.f32 %v2284, %v1730
        %v2286 = vadd.f32 %v2285, %v1740
        %v2287 = vadd.f32 %v2286, %v1750
        %v2288 = vadd.f32 %v2287, %v1760
        %v2289 = vadd.f32 %v2288, %v1770
        %v2290 = vadd.f32 %v2289, %v1780
        %v2291 = vadd.f32 %v2290, %v1790
        %v2292 = vadd.f32 %v2291, %v1800
        %v2293 = vadd.f32 %v2292, %v1810
        %v2294 = vadd.f32 %v2293, %v1820
        %v2295 = vadd.f32 %v2294, %v1830
        %v2296 = vadd.f32 %v2295, %v1840
        %v2297 = vadd.f32 %v2296, %v1850
        %v2298 = vadd.f32 %v2297, %v1860
        %v2299 = vadd.f32 %v2298, %v1870
        %v2300 = vadd.f32 %v2299, %v1880
        %v2301 = vadd.f32 %v2300, %v1890
        %v2302 = vadd.f32 %v2301, %v1900
        %v2303 = vadd.f32 %v2302, %v1910
        %v2304 = vadd.f32 %v2303, %v1920
        %v2305 = vadd.f32 %v2304, %v1930
        %v2306 = vadd.f32 %v2305, %v1940
        %v2307 = vrot.slane %v2306, 4
        %v2308 = vadd.f32 %v2306, %v2307
        %v2309 = vrot.slane %v2308, 2
        %v2310 = vadd.f32 %v2308, %v2309
        %v2311 = vrot.slane %v2310, 1
        %v2312 = vadd.f32 %v2310, %v2311
        %v2323 = vcombine.low %v1979, %v2016
        %v2324 = vcombine.low %v2053, %v2090
        %v2325 = vcombine.low %v2127, %v2164
        %v2326 = vcombine.low %v2201, %v2238
        %v2328 = vunpack.c.l.s4 1966171168
        %v2329 = vunpack.c.0.s8 %v2328
        %v2330 = vlaneseq
        %v2331 = vshrl.u32 %v2330, 7
        %v2332 = vsub.s32 %v2329, %v2331
        %v2333 = vrot.slane %v2323, %v2332
        %v2335 = vunpack.c.l.s4 1966171168
        %v2336 = vunpack.c.0.s8 %v2335
        %v2337 = vlaneseq
        %v2338 = vshrl.u32 %v2337, 7
        %v2339 = vsub.s32 %v2336, %v2338
        %v2340 = vrot.slane %v2324, %v2339
        %v2342 = vunpack.c.l.s4 1966171168
        %v2343 = vunpack.c.0.s8 %v2342
        %v2344 = vlaneseq
        %v2345 = vshrl.u32 %v2344, 7
        %v2346 = vsub.s32 %v2343, %v2345
        %v2347 = vrot.slane %v2325, %v2346
        %v2349 = vunpack.c.l.s4 1966171168
        %v2350 = vunpack.c.0.s8 %v2349
        %v2351 = vlaneseq
        %v2352 = vshrl.u32 %v2351, 7
        %v2353 = vsub.s32 %v2350, %v2352
        %v2354 = vrot.slane %v2326, %v2353
        %v2355 = vcombine.low %v2333, %v2340
        %v2356 = vcombine.low %v2347, %v2354
        %v2358 = vunpack.c.l.s4 1966171168
        %v2359 = vunpack.c.0.s8 %v2358
        %v2360 = vlaneseq
        %v2361 = vshrl.u32 %v2360, 7
        %v2362 = vsub.s32 %v2359, %v2361
        %v2363 = vrot.slane %v2355, %v2362
        %v2365 = vunpack.c.l.s4 1966171168
        %v2366 = vunpack.c.0.s8 %v2365
        %v2367 = vlaneseq
        %v2368 = vshrl.u32 %v2367, 7
        %v2369 = vsub.s32 %v2366, %v2368
        %v2370 = vrot.slane %v2356, %v2369
        %v2371 = vcombine.low %v2363, %v2370
        %v2372 = vcombine.low %v2275, %v2312
        %v2374 = vunpack.c.l.s4 1966171168
        %v2375 = vunpack.c.0.s8 %v2374
        %v2376 = vlaneseq
        %v2377 = vshrl.u32 %v2376, 7
        %v2378 = vsub.s32 %v2375, %v2377
        %v2379 = vrot.slane %v2372, %v2378
        %v2381 = vunpack.c.l.s4 1966171168
        %v2382 = vunpack.c.0.s8 %v2381
        %v2383 = vlaneseq
        %v2384 = vshrl.u32 %v2383, 7
        %v2385 = vsub.s32 %v2382, %v2384
        %v2386 = vrot.slane %v2379, %v2385
        %v2389 = vadd.f32 %v1941, %v2371
        %v2390 = vadd.f32 %v1942, %v2386
        %2391 = vst [vmem:[#allocation2] sm:$0xff] %v2389
        %v2392 = vlaneseq
        %vm2393 = vcmp.ge.s32.totalorder %v2392, 0
        %vm2394 = vcmp.lt.s32.totalorder %v2392, 256
        %vm2395 = vmand %vm2393, %vm2394
        %2396 = vst.msk [vmem:[#allocation2 + $0x8] sm:$0x3] %vm2395, %v2390
        // Predicated region
        $region45: #{_lambda_.1} parent=39 // pred_check
          %p2397 = pneg %p251
        $region46: #{_lambda_.1} parent=39 // pred_check_branch
          %2399 = sbr.rel (%p2397) target = $region48
        $region47: #{_lambda_.1} parent=39 // pred_region
          %v2400 = vld [vmem:[#allocation2] sm:$0xff]
          %v2401 = vld [vmem:[#allocation2 + $0x8] sm:$0x3]
          %v2402 = vmul.f32 %v2400, 0.00390625
          %v2403 = vmul.f32 %v2401, 0.00390625
          %v2406 = vlaneseq
          %v2407 = vshrl.u32 %v2406, 7
          %v2408 = vsub.s32 0, %v2407
          %v2409 = vrot.slane %v2402, %v2408
          %v2410 = vlaneseq
          %v2411 = vshrl.u32 %v2410, 7
          %v2412 = vsub.s32 1, %v2411
          %v2413 = vrot.slane %v2402, %v2412
          %v2414 = vlaneseq
          %v2415 = vshrl.u32 %v2414, 7
          %v2416 = vsub.s32 2, %v2415
          %v2417 = vrot.slane %v2402, %v2416
          %v2418 = vlaneseq
          %v2419 = vshrl.u32 %v2418, 7
          %v2420 = vsub.s32 3, %v2419
          %v2421 = vrot.slane %v2402, %v2420
          %v2422 = vlaneseq
          %v2423 = vshrl.u32 %v2422, 7
          %v2424 = vsub.s32 4, %v2423
          %v2425 = vrot.slane %v2402, %v2424
          %v2426 = vlaneseq
          %v2427 = vshrl.u32 %v2426, 7
          %v2428 = vsub.s32 5, %v2427
          %v2429 = vrot.slane %v2402, %v2428
          %v2430 = vlaneseq
          %v2431 = vshrl.u32 %v2430, 7
          %v2432 = vsub.s32 6, %v2431
          %v2433 = vrot.slane %v2402, %v2432
          %v2434 = vlaneseq
          %v2435 = vshrl.u32 %v2434, 7
          %v2436 = vsub.s32 7, %v2435
          %v2437 = vrot.slane %v2402, %v2436
          %v2438 = vlaneseq
          %v2439 = vshrl.u32 %v2438, 7
          %v2440 = vsub.s32 0, %v2439
          %v2441 = vrot.slane %v2403, %v2440
          %v2442 = vlaneseq
          %v2443 = vshrl.u32 %v2442, 7
          %v2444 = vsub.s32 1, %v2443
          %v2445 = vrot.slane %v2403, %v2444
          %v2456 = vpack.c.bf16 %v2409, %v2409
          %v2457 = vpack.c.bf16 %v2413, %v2413
          %v2458 = vpack.c.bf16 %v2417, %v2417
          %v2459 = vpack.c.bf16 %v2421, %v2421
          %v2460 = vpack.c.bf16 %v2425, %v2425
          %v2461 = vpack.c.bf16 %v2429, %v2429
          %v2462 = vpack.c.bf16 %v2433, %v2433
          %v2463 = vpack.c.bf16 %v2437, %v2437
          %v2464 = vpack.c.bf16 %v2441, %v2441
          %v2465 = vpack.c.bf16 %v2445, %v2445
          %v2466 = vld [vmem:[%s3] sm:$0xf]
          %v2467 = vld [vmem:[%s3 + $0x4] sm:$0xf]
          %v2468 = vld [vmem:[%s3 + $0x8] sm:$0xf]
          %v2469 = vld [vmem:[%s3 + $0xc] sm:$0xf]
          %v2470 = vld [vmem:[%s3 + $0x10] sm:$0xf]
          %v2471 = vld [vmem:[%s3 + $0x14] sm:$0xf]
          %v2472 = vld [vmem:[%s3 + $0x18] sm:$0xf]
          %v2473 = vld [vmem:[%s3 + $0x1c] sm:$0xf]
          %v2474 = vld [vmem:[%s3 + $0x20] sm:$0xf]
          %v2475 = vld [vmem:[%s3 + $0x24] sm:$0xf]
          %v2476 = vld [vmem:[%s3 + $0x28] sm:$0xf]
          %v2477 = vld [vmem:[%s3 + $0x2c] sm:$0xf]
          %v2478 = vld [vmem:[%s3 + $0x30] sm:$0xf]
          %v2479 = vld [vmem:[%s3 + $0x34] sm:$0xf]
          %v2480 = vld [vmem:[%s3 + $0x38] sm:$0xf]
          %v2481 = vld [vmem:[%s3 + $0x3c] sm:$0xf]
          %v2482 = vld [vmem:[%s3 + $0x40] sm:$0xf]
          %v2483 = vld [vmem:[%s3 + $0x44] sm:$0xf]
          %v2484 = vld [vmem:[%s3 + $0x48] sm:$0xf]
          %v2485 = vld [vmem:[%s3 + $0x4c] sm:$0xf]
          %v2486 = vld [vmem:[%s3 + $0x50] sm:$0xf]
          %v2487 = vld [vmem:[%s3 + $0x54] sm:$0xf]
          %v2488 = vld [vmem:[%s3 + $0x58] sm:$0xf]
          %v2489 = vld [vmem:[%s3 + $0x5c] sm:$0xf]
          %v2490 = vld [vmem:[%s3 + $0x60] sm:$0xf]
          %v2491 = vld [vmem:[%s3 + $0x64] sm:$0xf]
          %v2492 = vld [vmem:[%s3 + $0x68] sm:$0xf]
          %v2493 = vld [vmem:[%s3 + $0x6c] sm:$0xf]
          %v2494 = vld [vmem:[%s3 + $0x70] sm:$0xf]
          %v2495 = vld [vmem:[%s3 + $0x74] sm:$0xf]
          %v2496 = vld [vmem:[%s3 + $0x78] sm:$0xf]
          %v2497 = vld [vmem:[%s3 + $0x7c] sm:$0xf]
          %v2498 = vld [vmem:[%s3 + $0x80] sm:$0xf]
          %v2499 = vld [vmem:[%s3 + $0x84] sm:$0xf]
          %v2500 = vld [vmem:[%s3 + $0x88] sm:$0xf]
          %v2501 = vld [vmem:[%s3 + $0x8c] sm:$0xf]
          %v2502 = vld [vmem:[%s3 + $0x90] sm:$0xf]
          %v2503 = vld [vmem:[%s3 + $0x94] sm:$0xf]
          %v2504 = vld [vmem:[%s3 + $0x98] sm:$0xf]
          %v2505 = vld [vmem:[%s3 + $0x9c] sm:$0xf]
          %v2506 = vld [vmem:[%s3 + $0xa0] sm:$0xf]
          %v2507 = vld [vmem:[%s3 + $0xa4] sm:$0xf]
          %v2508 = vld [vmem:[%s3 + $0xa8] sm:$0xf]
          %v2509 = vld [vmem:[%s3 + $0xac] sm:$0xf]
          %v2510 = vld [vmem:[%s3 + $0xb0] sm:$0xf]
          %v2511 = vld [vmem:[%s3 + $0xb4] sm:$0xf]
          %v2512 = vld [vmem:[%s3 + $0xb8] sm:$0xf]
          %v2513 = vld [vmem:[%s3 + $0xbc] sm:$0xf]
          %v2514 = vld [vmem:[%s3 + $0xc0] sm:$0xf]
          %v2515 = vld [vmem:[%s3 + $0xc4] sm:$0xf]
          %v2516 = vld [vmem:[%s3 + $0xc8] sm:$0xf]
          %v2517 = vld [vmem:[%s3 + $0xcc] sm:$0xf]
          %v2518 = vld [vmem:[%s3 + $0xd0] sm:$0xf]
          %v2519 = vld [vmem:[%s3 + $0xd4] sm:$0xf]
          %v2520 = vld [vmem:[%s3 + $0xd8] sm:$0xf]
          %v2521 = vld [vmem:[%s3 + $0xdc] sm:$0xf]
          %v2522 = vld [vmem:[%s3 + $0xe0] sm:$0xf]
          %v2523 = vld [vmem:[%s3 + $0xe4] sm:$0xf]
          %v2524 = vld [vmem:[%s3 + $0xe8] sm:$0xf]
          %v2525 = vld [vmem:[%s3 + $0xec] sm:$0xf]
          %v2526 = vld [vmem:[%s3 + $0xf0] sm:$0xf]
          %v2527 = vld [vmem:[%s3 + $0xf4] sm:$0xf]
          %v2528 = vld [vmem:[%s3 + $0xf8] sm:$0xf]
          %v2529 = vld [vmem:[%s3 + $0xfc] sm:$0xf]
          %v2530 = vld [vmem:[%s3 + $0x100] sm:$0xf]
          %v2531 = vld [vmem:[%s3 + $0x104] sm:$0xf]
          %v2532 = vld [vmem:[%s3 + $0x108] sm:$0xf]
          %v2533 = vld [vmem:[%s3 + $0x10c] sm:$0xf]
          %v2534 = vld [vmem:[%s3 + $0x110] sm:$0xf]
          %v2535 = vld [vmem:[%s3 + $0x114] sm:$0xf]
          %v2536 = vld [vmem:[%s3 + $0x118] sm:$0xf]
          %v2537 = vld [vmem:[%s3 + $0x11c] sm:$0xf]
          %v2538 = vld [vmem:[%s3 + $0x120] sm:$0xf]
          %v2539 = vld [vmem:[%s3 + $0x124] sm:$0xf]
          %v2540 = vld [vmem:[%s3 + $0x128] sm:$0xf]
          %v2541 = vld [vmem:[%s3 + $0x12c] sm:$0xf]
          %v2542 = vld [vmem:[%s3 + $0x130] sm:$0xf]
          %v2543 = vld [vmem:[%s3 + $0x134] sm:$0xf]
          %v2544 = vld [vmem:[%s3 + $0x138] sm:$0xf]
          %v2545 = vld [vmem:[%s3 + $0x13c] sm:$0xf]
          %v2546 = vld [vmem:[%s3 + $0x140] sm:$0xf]
          %v2547 = vld [vmem:[%s3 + $0x144] sm:$0xf]
          %v2548 = vld [vmem:[%s3 + $0x148] sm:$0xf]
          %v2549 = vld [vmem:[%s3 + $0x14c] sm:$0xf]
          %v2550 = vld [vmem:[%s3 + $0x150] sm:$0xf]
          %v2551 = vld [vmem:[%s3 + $0x154] sm:$0xf]
          %v2552 = vld [vmem:[%s3 + $0x158] sm:$0xf]
          %v2553 = vld [vmem:[%s3 + $0x15c] sm:$0xf]
          %v2554 = vld [vmem:[%s3 + $0x160] sm:$0xf]
          %v2555 = vld [vmem:[%s3 + $0x164] sm:$0xf]
          %v2556 = vld [vmem:[%s3 + $0x168] sm:$0xf]
          %v2557 = vld [vmem:[%s3 + $0x16c] sm:$0xf]
          %v2558 = vld [vmem:[%s3 + $0x170] sm:$0xf]
          %v2559 = vld [vmem:[%s3 + $0x174] sm:$0xf]
          %v2560 = vld [vmem:[%s3 + $0x178] sm:$0xf]
          %v2561 = vld [vmem:[%s3 + $0x17c] sm:$0xf]
          %v2562 = vld [vmem:[%s3 + $0x180] sm:$0xf]
          %v2563 = vld [vmem:[%s3 + $0x184] sm:$0xf]
          %v2564 = vld [vmem:[%s3 + $0x188] sm:$0xf]
          %v2565 = vld [vmem:[%s3 + $0x18c] sm:$0xf]
          %v2566 = vld [vmem:[%s3 + $0x190] sm:$0xf]
          %v2567 = vld [vmem:[%s3 + $0x194] sm:$0xf]
          %v2568 = vld [vmem:[%s3 + $0x198] sm:$0xf]
          %v2569 = vld [vmem:[%s3 + $0x19c] sm:$0xf]
          %v2570 = vld [vmem:[%s3 + $0x1a0] sm:$0xf]
          %v2571 = vld [vmem:[%s3 + $0x1a4] sm:$0xf]
          %v2572 = vld [vmem:[%s3 + $0x1a8] sm:$0xf]
          %v2573 = vld [vmem:[%s3 + $0x1ac] sm:$0xf]
          %v2574 = vld [vmem:[%s3 + $0x1b0] sm:$0xf]
          %v2575 = vld [vmem:[%s3 + $0x1b4] sm:$0xf]
          %v2576 = vld [vmem:[%s3 + $0x1b8] sm:$0xf]
          %v2577 = vld [vmem:[%s3 + $0x1bc] sm:$0xf]
          %v2578 = vld [vmem:[%s3 + $0x1c0] sm:$0xf]
          %v2579 = vld [vmem:[%s3 + $0x1c4] sm:$0xf]
          %v2580 = vld [vmem:[%s3 + $0x1c8] sm:$0xf]
          %v2581 = vld [vmem:[%s3 + $0x1cc] sm:$0xf]
          %v2582 = vld [vmem:[%s3 + $0x1d0] sm:$0xf]
          %v2583 = vld [vmem:[%s3 + $0x1d4] sm:$0xf]
          %v2584 = vld [vmem:[%s3 + $0x1d8] sm:$0xf]
          %v2585 = vld [vmem:[%s3 + $0x1dc] sm:$0xf]
          %v2586 = vld [vmem:[%s3 + $0x1e0] sm:$0xf]
          %v2587 = vld [vmem:[%s3 + $0x1e4] sm:$0xf]
          %v2588 = vld [vmem:[%s3 + $0x1e8] sm:$0xf]
          %v2589 = vld [vmem:[%s3 + $0x1ec] sm:$0xf]
          %v2590 = vld [vmem:[%s3 + $0x1f0] sm:$0xf]
          %v2591 = vld [vmem:[%s3 + $0x1f4] sm:$0xf]
          %v2592 = vld [vmem:[%s3 + $0x1f8] sm:$0xf]
          %v2593 = vld [vmem:[%s3 + $0x1fc] sm:$0xf]
          %v2594 = vld [vmem:[%s3 + $0x200] sm:$0xf]
          %v2595 = vld [vmem:[%s3 + $0x204] sm:$0xf]
          %v2596 = vld [vmem:[%s3 + $0x208] sm:$0xf]
          %v2597 = vld [vmem:[%s3 + $0x20c] sm:$0xf]
          %v2598 = vld [vmem:[%s3 + $0x210] sm:$0xf]
          %v2599 = vld [vmem:[%s3 + $0x214] sm:$0xf]
          %v2600 = vld [vmem:[%s3 + $0x218] sm:$0xf]
          %v2601 = vld [vmem:[%s3 + $0x21c] sm:$0xf]
          %v2602 = vld [vmem:[%s3 + $0x220] sm:$0xf]
          %v2603 = vld [vmem:[%s3 + $0x224] sm:$0xf]
          %v2604 = vld [vmem:[%s3 + $0x228] sm:$0xf]
          %v2605 = vld [vmem:[%s3 + $0x22c] sm:$0xf]
          %v2606 = vld [vmem:[%s3 + $0x230] sm:$0xf]
          %v2607 = vld [vmem:[%s3 + $0x234] sm:$0xf]
          %v2608 = vld [vmem:[%s3 + $0x238] sm:$0xf]
          %v2609 = vld [vmem:[%s3 + $0x23c] sm:$0xf]
          %v2610 = vld [vmem:[%s3 + $0x240] sm:$0xf]
          %v2611 = vld [vmem:[%s3 + $0x244] sm:$0xf]
          %v2612 = vld [vmem:[%s3 + $0x248] sm:$0xf]
          %v2613 = vld [vmem:[%s3 + $0x24c] sm:$0xf]
          %v2614 = vld [vmem:[%s3 + $0x250] sm:$0xf]
          %v2615 = vld [vmem:[%s3 + $0x254] sm:$0xf]
          %v2616 = vld [vmem:[%s3 + $0x258] sm:$0xf]
          %v2617 = vld [vmem:[%s3 + $0x25c] sm:$0xf]
          %v2618 = vld [vmem:[%s3 + $0x260] sm:$0xf]
          %v2619 = vld [vmem:[%s3 + $0x264] sm:$0xf]
          %v2620 = vld [vmem:[%s3 + $0x268] sm:$0xf]
          %v2621 = vld [vmem:[%s3 + $0x26c] sm:$0xf]
          %v2622 = vld [vmem:[%s3 + $0x270] sm:$0xf]
          %v2623 = vld [vmem:[%s3 + $0x274] sm:$0xf]
          %v2624 = vld [vmem:[%s3 + $0x278] sm:$0xf]
          %v2625 = vld [vmem:[%s3 + $0x27c] sm:$0xf]
          %v2626 = vld [vmem:[%s4] sm:$0x1]
          %v2787 = vunpack.c.l.b16 %v2466
          %v2788 = vunpack.c.l.b16 %v2467
          %v2789 = vunpack.c.l.b16 %v2468
          %v2790 = vunpack.c.l.b16 %v2469
          %v2791 = vunpack.c.l.b16 %v2470
          %v2792 = vunpack.c.l.b16 %v2471
          %v2793 = vunpack.c.l.b16 %v2472
          %v2794 = vunpack.c.l.b16 %v2473
          %v2795 = vunpack.c.l.b16 %v2474
          %v2796 = vunpack.c.l.b16 %v2475
          %v2797 = vunpack.c.l.b16 %v2476
          %v2798 = vunpack.c.l.b16 %v2477
          %v2799 = vunpack.c.l.b16 %v2478
          %v2800 = vunpack.c.l.b16 %v2479
          %v2801 = vunpack.c.l.b16 %v2480
          %v2802 = vunpack.c.l.b16 %v2481
          %v2803 = vunpack.c.l.b16 %v2482
          %v2804 = vunpack.c.l.b16 %v2483
          %v2805 = vunpack.c.l.b16 %v2484
          %v2806 = vunpack.c.l.b16 %v2485
          %v2807 = vunpack.c.l.b16 %v2486
          %v2808 = vunpack.c.l.b16 %v2487
          %v2809 = vunpack.c.l.b16 %v2488
          %v2810 = vunpack.c.l.b16 %v2489
          %v2811 = vunpack.c.l.b16 %v2490
          %v2812 = vunpack.c.l.b16 %v2491
          %v2813 = vunpack.c.l.b16 %v2492
          %v2814 = vunpack.c.l.b16 %v2493
          %v2815 = vunpack.c.l.b16 %v2494
          %v2816 = vunpack.c.l.b16 %v2495
          %v2817 = vunpack.c.l.b16 %v2496
          %v2818 = vunpack.c.l.b16 %v2497
          %v2819 = vunpack.c.l.b16 %v2498
          %v2820 = vunpack.c.l.b16 %v2499
          %v2821 = vunpack.c.l.b16 %v2500
          %v2822 = vunpack.c.l.b16 %v2501
          %v2823 = vunpack.c.l.b16 %v2502
          %v2824 = vunpack.c.l.b16 %v2503
          %v2825 = vunpack.c.l.b16 %v2504
          %v2826 = vunpack.c.l.b16 %v2505
          %v2827 = vunpack.c.l.b16 %v2506
          %v2828 = vunpack.c.l.b16 %v2507
          %v2829 = vunpack.c.l.b16 %v2508
          %v2830 = vunpack.c.l.b16 %v2509
          %v2831 = vunpack.c.l.b16 %v2510
          %v2832 = vunpack.c.l.b16 %v2511
          %v2833 = vunpack.c.l.b16 %v2512
          %v2834 = vunpack.c.l.b16 %v2513
          %v2835 = vunpack.c.l.b16 %v2514
          %v2836 = vunpack.c.l.b16 %v2515
          %v2837 = vunpack.c.l.b16 %v2516
          %v2838 = vunpack.c.l.b16 %v2517
          %v2839 = vunpack.c.l.b16 %v2518
          %v2840 = vunpack.c.l.b16 %v2519
          %v2841 = vunpack.c.l.b16 %v2520
          %v2842 = vunpack.c.l.b16 %v2521
          %v2843 = vunpack.c.l.b16 %v2522
          %v2844 = vunpack.c.l.b16 %v2523
          %v2845 = vunpack.c.l.b16 %v2524
          %v2846 = vunpack.c.l.b16 %v2525
          %v2847 = vunpack.c.l.b16 %v2526
          %v2848 = vunpack.c.l.b16 %v2527
          %v2849 = vunpack.c.l.b16 %v2528
          %v2850 = vunpack.c.l.b16 %v2529
          %v2851 = vunpack.c.l.b16 %v2530
          %v2852 = vunpack.c.l.b16 %v2531
          %v2853 = vunpack.c.l.b16 %v2532
          %v2854 = vunpack.c.l.b16 %v2533
          %v2855 = vunpack.c.l.b16 %v2534
          %v2856 = vunpack.c.l.b16 %v2535
          %v2857 = vunpack.c.l.b16 %v2536
          %v2858 = vunpack.c.l.b16 %v2537
          %v2859 = vunpack.c.l.b16 %v2538
          %v2860 = vunpack.c.l.b16 %v2539
          %v2861 = vunpack.c.l.b16 %v2540
          %v2862 = vunpack.c.l.b16 %v2541
          %v2863 = vunpack.c.l.b16 %v2542
          %v2864 = vunpack.c.l.b16 %v2543
          %v2865 = vunpack.c.l.b16 %v2544
          %v2866 = vunpack.c.l.b16 %v2545
          %v2867 = vunpack.c.l.b16 %v2546
          %v2868 = vunpack.c.l.b16 %v2547
          %v2869 = vunpack.c.l.b16 %v2548
          %v2870 = vunpack.c.l.b16 %v2549
          %v2871 = vunpack.c.l.b16 %v2550
          %v2872 = vunpack.c.l.b16 %v2551
          %v2873 = vunpack.c.l.b16 %v2552
          %v2874 = vunpack.c.l.b16 %v2553
          %v2875 = vunpack.c.l.b16 %v2554
          %v2876 = vunpack.c.l.b16 %v2555
          %v2877 = vunpack.c.l.b16 %v2556
          %v2878 = vunpack.c.l.b16 %v2557
          %v2879 = vunpack.c.l.b16 %v2558
          %v2880 = vunpack.c.l.b16 %v2559
          %v2881 = vunpack.c.l.b16 %v2560
          %v2882 = vunpack.c.l.b16 %v2561
          %v2883 = vunpack.c.l.b16 %v2562
          %v2884 = vunpack.c.l.b16 %v2563
          %v2885 = vunpack.c.l.b16 %v2564
          %v2886 = vunpack.c.l.b16 %v2565
          %v2887 = vunpack.c.l.b16 %v2566
          %v2888 = vunpack.c.l.b16 %v2567
          %v2889 = vunpack.c.l.b16 %v2568
          %v2890 = vunpack.c.l.b16 %v2569
          %v2891 = vunpack.c.l.b16 %v2570
          %v2892 = vunpack.c.l.b16 %v2571
          %v2893 = vunpack.c.l.b16 %v2572
          %v2894 = vunpack.c.l.b16 %v2573
          %v2895 = vunpack.c.l.b16 %v2574
          %v2896 = vunpack.c.l.b16 %v2575
          %v2897 = vunpack.c.l.b16 %v2576
          %v2898 = vunpack.c.l.b16 %v2577
          %v2899 = vunpack.c.l.b16 %v2578
          %v2900 = vunpack.c.l.b16 %v2579
          %v2901 = vunpack.c.l.b16 %v2580
          %v2902 = vunpack.c.l.b16 %v2581
          %v2903 = vunpack.c.l.b16 %v2582
          %v2904 = vunpack.c.l.b16 %v2583
          %v2905 = vunpack.c.l.b16 %v2584
          %v2906 = vunpack.c.l.b16 %v2585
          %v2907 = vunpack.c.l.b16 %v2586
          %v2908 = vunpack.c.l.b16 %v2587
          %v2909 = vunpack.c.l.b16 %v2588
          %v2910 = vunpack.c.l.b16 %v2589
          %v2911 = vunpack.c.l.b16 %v2590
          %v2912 = vunpack.c.l.b16 %v2591
          %v2913 = vunpack.c.l.b16 %v2592
          %v2914 = vunpack.c.l.b16 %v2593
          %v2915 = vunpack.c.l.b16 %v2594
          %v2916 = vunpack.c.l.b16 %v2595
          %v2917 = vunpack.c.l.b16 %v2596
          %v2918 = vunpack.c.l.b16 %v2597
          %v2919 = vunpack.c.l.b16 %v2598
          %v2920 = vunpack.c.l.b16 %v2599
          %v2921 = vunpack.c.l.b16 %v2600
          %v2922 = vunpack.c.l.b16 %v2601
          %v2923 = vunpack.c.l.b16 %v2602
          %v2924 = vunpack.c.l.b16 %v2603
          %v2925 = vunpack.c.l.b16 %v2604
          %v2926 = vunpack.c.l.b16 %v2605
          %v2927 = vunpack.c.l.b16 %v2606
          %v2928 = vunpack.c.l.b16 %v2607
          %v2929 = vunpack.c.l.b16 %v2608
          %v2930 = vunpack.c.l.b16 %v2609
          %v2931 = vunpack.c.l.b16 %v2610
          %v2932 = vunpack.c.l.b16 %v2611
          %v2933 = vunpack.c.l.b16 %v2612
          %v2934 = vunpack.c.l.b16 %v2613
          %v2935 = vunpack.c.l.b16 %v2614
          %v2936 = vunpack.c.l.b16 %v2615
          %v2937 = vunpack.c.l.b16 %v2616
          %v2938 = vunpack.c.l.b16 %v2617
          %v2939 = vunpack.c.l.b16 %v2618
          %v2940 = vunpack.c.l.b16 %v2619
          %v2941 = vunpack.c.l.b16 %v2620
          %v2942 = vunpack.c.l.b16 %v2621
          %v2943 = vunpack.c.l.b16 %v2622
          %v2944 = vunpack.c.l.b16 %v2623
          %v2945 = vunpack.c.l.b16 %v2624
          %v2946 = vunpack.c.l.b16 %v2625
          %v2947 = vpack.c.b16 %v2788, %v2787
          %v2948 = vpack.c.b16 %v2790, %v2789
          %v2949 = vpack.c.b16 %v2792, %v2791
          %v2950 = vpack.c.b16 %v2794, %v2793
          %v2951 = vpack.c.b16 %v2796, %v2795
          %v2952 = vpack.c.b16 %v2798, %v2797
          %v2953 = vpack.c.b16 %v2800, %v2799
          %v2954 = vpack.c.b16 %v2802, %v2801
          %v2955 = vpack.c.b16 %v2804, %v2803
          %v2956 = vpack.c.b16 %v2806, %v2805
          %v2957 = vpack.c.b16 %v2808, %v2807
          %v2958 = vpack.c.b16 %v2810, %v2809
          %v2959 = vpack.c.b16 %v2812, %v2811
          %v2960 = vpack.c.b16 %v2814, %v2813
          %v2961 = vpack.c.b16 %v2816, %v2815
          %v2962 = vpack.c.b16 %v2818, %v2817
          %v2963 = vpack.c.b16 %v2820, %v2819
          %v2964 = vpack.c.b16 %v2822, %v2821
          %v2965 = vpack.c.b16 %v2824, %v2823
          %v2966 = vpack.c.b16 %v2826, %v2825
          %v2967 = vpack.c.b16 %v2828, %v2827
          %v2968 = vpack.c.b16 %v2830, %v2829
          %v2969 = vpack.c.b16 %v2832, %v2831
          %v2970 = vpack.c.b16 %v2834, %v2833
          %v2971 = vpack.c.b16 %v2836, %v2835
          %v2972 = vpack.c.b16 %v2838, %v2837
          %v2973 = vpack.c.b16 %v2840, %v2839
          %v2974 = vpack.c.b16 %v2842, %v2841
          %v2975 = vpack.c.b16 %v2844, %v2843
          %v2976 = vpack.c.b16 %v2846, %v2845
          %v2977 = vpack.c.b16 %v2848, %v2847
          %v2978 = vpack.c.b16 %v2850, %v2849
          %v2979 = vpack.c.b16 %v2852, %v2851
          %v2980 = vpack.c.b16 %v2854, %v2853
          %v2981 = vpack.c.b16 %v2856, %v2855
          %v2982 = vpack.c.b16 %v2858, %v2857
          %v2983 = vpack.c.b16 %v2860, %v2859
          %v2984 = vpack.c.b16 %v2862, %v2861
          %v2985 = vpack.c.b16 %v2864, %v2863
          %v2986 = vpack.c.b16 %v2866, %v2865
          %v2987 = vpack.c.b16 %v2868, %v2867
          %v2988 = vpack.c.b16 %v2870, %v2869
          %v2989 = vpack.c.b16 %v2872, %v2871
          %v2990 = vpack.c.b16 %v2874, %v2873
          %v2991 = vpack.c.b16 %v2876, %v2875
          %v2992 = vpack.c.b16 %v2878, %v2877
          %v2993 = vpack.c.b16 %v2880, %v2879
          %v2994 = vpack.c.b16 %v2882, %v2881
          %v2995 = vpack.c.b16 %v2884, %v2883
          %v2996 = vpack.c.b16 %v2886, %v2885
          %v2997 = vpack.c.b16 %v2888, %v2887
          %v2998 = vpack.c.b16 %v2890, %v2889
          %v2999 = vpack.c.b16 %v2892, %v2891
          %v3000 = vpack.c.b16 %v2894, %v2893
          %v3001 = vpack.c.b16 %v2896, %v2895
          %v3002 = vpack.c.b16 %v2898, %v2897
          %v3003 = vpack.c.b16 %v2900, %v2899
          %v3004 = vpack.c.b16 %v2902, %v2901
          %v3005 = vpack.c.b16 %v2904, %v2903
          %v3006 = vpack.c.b16 %v2906, %v2905
          %v3007 = vpack.c.b16 %v2908, %v2907
          %v3008 = vpack.c.b16 %v2910, %v2909
          %v3009 = vpack.c.b16 %v2912, %v2911
          %v3010 = vpack.c.b16 %v2914, %v2913
          %v3011 = vpack.c.b16 %v2916, %v2915
          %v3012 = vpack.c.b16 %v2918, %v2917
          %v3013 = vpack.c.b16 %v2920, %v2919
          %v3014 = vpack.c.b16 %v2922, %v2921
          %v3015 = vpack.c.b16 %v2924, %v2923
          %v3016 = vpack.c.b16 %v2926, %v2925
          %v3017 = vpack.c.b16 %v2928, %v2927
          %v3018 = vpack.c.b16 %v2930, %v2929
          %v3019 = vpack.c.b16 %v2932, %v2931
          %v3020 = vpack.c.b16 %v2934, %v2933
          %v3021 = vpack.c.b16 %v2936, %v2935
          %v3022 = vpack.c.b16 %v2938, %v2937
          %v3023 = vpack.c.b16 %v2940, %v2939
          %v3024 = vpack.c.b16 %v2942, %v2941
          %v3025 = vpack.c.b16 %v2944, %v2943
          %v3026 = vpack.c.b16 %v2946, %v2945
          %3107 = vmatprep.subr.bf16.mxu0 0
          %3108 = vmatpush1.bf16.msra.mxu0 %v2947
          %3109 = vmatprep.subr.bf16.mxu0 0
          %3110 = vmatpush1.bf16.msra.mxu0 %v2948
          %3111 = vmatprep.subr.bf16.mxu0 0
          %3112 = vmatpush1.bf16.msra.mxu0 %v2949
          %3113 = vmatprep.subr.bf16.mxu0 0
          %3114 = vmatpush1.bf16.msra.mxu0 %v2950
          %3115 = vmatprep.subr.bf16.mxu0 0
          %3116 = vmatpush1.bf16.msra.mxu0 %v2951
          %3117 = vmatprep.subr.bf16.mxu0 0
          %3118 = vmatpush1.bf16.msra.mxu0 %v2952
          %3119 = vmatprep.subr.bf16.mxu0 0
          %3120 = vmatpush1.bf16.msra.mxu0 %v2953
          %3121 = vmatprep.subr.bf16.mxu0 0
          %3122 = vmatpush1.bf16.msra.mxu0 %v2954
          %3123 = vmatprep.subr.bf16.mxu0 0
          %3124 = vmatpush1.bf16.msra.mxu0 %v2955
          %3125 = vmatprep.subr.bf16.mxu0 0
          %3126 = vmatpush1.bf16.msra.mxu0 %v2956
          %3127 = vmatprep.subr.bf16.mxu0 0
          %3128 = vmatpush1.bf16.msra.mxu0 %v2957
          %3129 = vmatprep.subr.bf16.mxu0 0
          %3130 = vmatpush1.bf16.msra.mxu0 %v2958
          %3131 = vmatprep.subr.bf16.mxu0 0
          %3132 = vmatpush1.bf16.msra.mxu0 %v2959
          %3133 = vmatprep.subr.bf16.mxu0 0
          %3134 = vmatpush1.bf16.msra.mxu0 %v2960
          %3135 = vmatprep.subr.bf16.mxu0 0
          %3136 = vmatpush1.bf16.msra.mxu0 %v2961
          %3137 = vmatprep.subr.bf16.mxu0 0
          %3138 = vmatpush1.bf16.msra.mxu0 %v2962
          %3139 = vmatprep.mubr.bf16.mxu0 %v2457
          %3140 = vmatmul.mubr.bf16.gmra.mrb[0].mxu0 %v2456
          %v3141 = vpop.f32.mrb[0].mxu0
          %v3142 = vadd.f32 %v2626, %v3141
          %v3143 = vpop.f32.mrb[0].mxu0
          %v3144 = vpop.f32.mrb[0].mxu0
          %v3145 = vpop.f32.mrb[0].mxu0
          %3146 = vdwg.mxu0
          %3147 = vmatprep.subr.bf16.mxu0 0
          %3148 = vmatpush1.bf16.msra.mxu0 %v2963
          %3149 = vmatprep.subr.bf16.mxu0 0
          %3150 = vmatpush1.bf16.msra.mxu0 %v2964
          %3151 = vmatprep.subr.bf16.mxu0 0
          %3152 = vmatpush1.bf16.msra.mxu0 %v2965
          %3153 = vmatprep.subr.bf16.mxu0 0
          %3154 = vmatpush1.bf16.msra.mxu0 %v2966
          %3155 = vmatprep.subr.bf16.mxu0 0
          %3156 = vmatpush1.bf16.msra.mxu0 %v2967
          %3157 = vmatprep.subr.bf16.mxu0 0
          %3158 = vmatpush1.bf16.msra.mxu0 %v2968
          %3159 = vmatprep.subr.bf16.mxu0 0
          %3160 = vmatpush1.bf16.msra.mxu0 %v2969
          %3161 = vmatprep.subr.bf16.mxu0 0
          %3162 = vmatpush1.bf16.msra.mxu0 %v2970
          %3163 = vmatprep.subr.bf16.mxu0 0
          %3164 = vmatpush1.bf16.msra.mxu0 %v2971
          %3165 = vmatprep.subr.bf16.mxu0 0
          %3166 = vmatpush1.bf16.msra.mxu0 %v2972
          %3167 = vmatprep.subr.bf16.mxu0 0
          %3168 = vmatpush1.bf16.msra.mxu0 %v2973
          %3169 = vmatprep.subr.bf16.mxu0 0
          %3170 = vmatpush1.bf16.msra.mxu0 %v2974
          %3171 = vmatprep.subr.bf16.mxu0 0
          %3172 = vmatpush1.bf16.msra.mxu0 %v2975
          %3173 = vmatprep.subr.bf16.mxu0 0
          %3174 = vmatpush1.bf16.msra.mxu0 %v2976
          %3175 = vmatprep.subr.bf16.mxu0 0
          %3176 = vmatpush1.bf16.msra.mxu0 %v2977
          %3177 = vmatprep.subr.bf16.mxu0 0
          %3178 = vmatpush1.bf16.msra.mxu0 %v2978
          %3179 = vmatprep.mubr.bf16.mxu0 %v2459
          %3180 = vmatmul.mubr.bf16.gmra.mrb[0].mxu0 %v2458
          %v3181 = vpop.f32.mrb[0].mxu0
          %v3182 = vadd.f32 %v3142, %v3181
          %v3183 = vpop.f32.mrb[0].mxu0
          %v3184 = vpop.f32.mrb[0].mxu0
          %v3185 = vpop.f32.mrb[0].mxu0
          %3186 = vdwg.mxu0
          %3187 = vmatprep.subr.bf16.mxu0 0
          %3188 = vmatpush1.bf16.msra.mxu0 %v2979
          %3189 = vmatprep.subr.bf16.mxu0 0
          %3190 = vmatpush1.bf16.msra.mxu0 %v2980
          %3191 = vmatprep.subr.bf16.mxu0 0
          %3192 = vmatpush1.bf16.msra.mxu0 %v2981
          %3193 = vmatprep.subr.bf16.mxu0 0
          %3194 = vmatpush1.bf16.msra.mxu0 %v2982
          %3195 = vmatprep.subr.bf16.mxu0 0
          %3196 = vmatpush1.bf16.msra.mxu0 %v2983
          %3197 = vmatprep.subr.bf16.mxu0 0
          %3198 = vmatpush1.bf16.msra.mxu0 %v2984
          %3199 = vmatprep.subr.bf16.mxu0 0
          %3200 = vmatpush1.bf16.msra.mxu0 %v2985
          %3201 = vmatprep.subr.bf16.mxu0 0
          %3202 = vmatpush1.bf16.msra.mxu0 %v2986
          %3203 = vmatprep.subr.bf16.mxu0 0
          %3204 = vmatpush1.bf16.msra.mxu0 %v2987
          %3205 = vmatprep.subr.bf16.mxu0 0
          %3206 = vmatpush1.bf16.msra.mxu0 %v2988
          %3207 = vmatprep.subr.bf16.mxu0 0
          %3208 = vmatpush1.bf16.msra.mxu0 %v2989
          %3209 = vmatprep.subr.bf16.mxu0 0
          %3210 = vmatpush1.bf16.msra.mxu0 %v2990
          %3211 = vmatprep.subr.bf16.mxu0 0
          %3212 = vmatpush1.bf16.msra.mxu0 %v2991
          %3213 = vmatprep.subr.bf16.mxu0 0
          %3214 = vmatpush1.bf16.msra.mxu0 %v2992
          %3215 = vmatprep.subr.bf16.mxu0 0
          %3216 = vmatpush1.bf16.msra.mxu0 %v2993
          %3217 = vmatprep.subr.bf16.mxu0 0
          %3218 = vmatpush1.bf16.msra.mxu0 %v2994
          %3219 = vmatprep.mubr.bf16.mxu0 %v2461
          %3220 = vmatmul.mubr.bf16.gmra.mrb[0].mxu0 %v2460
          %v3221 = vpop.f32.mrb[0].mxu0
          %v3222 = vadd.f32 %v3182, %v3221
          %v3223 = vpop.f32.mrb[0].mxu0
          %v3224 = vpop.f32.mrb[0].mxu0
          %v3225 = vpop.f32.mrb[0].mxu0
          %3226 = vdwg.mxu0
          %3227 = vmatprep.subr.bf16.mxu0 0
          %3228 = vmatpush1.bf16.msra.mxu0 %v2995
          %3229 = vmatprep.subr.bf16.mxu0 0
          %3230 = vmatpush1.bf16.msra.mxu0 %v2996
          %3231 = vmatprep.subr.bf16.mxu0 0
          %3232 = vmatpush1.bf16.msra.mxu0 %v2997
          %3233 = vmatprep.subr.bf16.mxu0 0
          %3234 = vmatpush1.bf16.msra.mxu0 %v2998
          %3235 = vmatprep.subr.bf16.mxu0 0
          %3236 = vmatpush1.bf16.msra.mxu0 %v2999
          %3237 = vmatprep.subr.bf16.mxu0 0
          %3238 = vmatpush1.bf16.msra.mxu0 %v3000
          %3239 = vmatprep.subr.bf16.mxu0 0
          %3240 = vmatpush1.bf16.msra.mxu0 %v3001
          %3241 = vmatprep.subr.bf16.mxu0 0
          %3242 = vmatpush1.bf16.msra.mxu0 %v3002
          %3243 = vmatprep.subr.bf16.mxu0 0
          %3244 = vmatpush1.bf16.msra.mxu0 %v3003
          %3245 = vmatprep.subr.bf16.mxu0 0
          %3246 = vmatpush1.bf16.msra.mxu0 %v3004
          %3247 = vmatprep.subr.bf16.mxu0 0
          %3248 = vmatpush1.bf16.msra.mxu0 %v3005
          %3249 = vmatprep.subr.bf16.mxu0 0
          %3250 = vmatpush1.bf16.msra.mxu0 %v3006
          %3251 = vmatprep.subr.bf16.mxu0 0
          %3252 = vmatpush1.bf16.msra.mxu0 %v3007
          %3253 = vmatprep.subr.bf16.mxu0 0
          %3254 = vmatpush1.bf16.msra.mxu0 %v3008
          %3255 = vmatprep.subr.bf16.mxu0 0
          %3256 = vmatpush1.bf16.msra.mxu0 %v3009
          %3257 = vmatprep.subr.bf16.mxu0 0
          %3258 = vmatpush1.bf16.msra.mxu0 %v3010
          %3259 = vmatprep.mubr.bf16.mxu0 %v2463
          %3260 = vmatmul.mubr.bf16.gmra.mrb[0].mxu0 %v2462
          %v3261 = vpop.f32.mrb[0].mxu0
          %v3262 = vadd.f32 %v3222, %v3261
          %v3263 = vpop.f32.mrb[0].mxu0
          %v3264 = vpop.f32.mrb[0].mxu0
          %v3265 = vpop.f32.mrb[0].mxu0
          %3266 = vdwg.mxu0
          %3267 = vmatprep.subr.bf16.mxu0 0
          %3268 = vmatpush1.bf16.msra.mxu0 %v3011
          %3269 = vmatprep.subr.bf16.mxu0 0
          %3270 = vmatpush1.bf16.msra.mxu0 %v3012
          %3271 = vmatprep.subr.bf16.mxu0 0
          %3272 = vmatpush1.bf16.msra.mxu0 %v3013
          %3273 = vmatprep.subr.bf16.mxu0 0
          %3274 = vmatpush1.bf16.msra.mxu0 %v3014
          %3275 = vmatprep.subr.bf16.mxu0 0
          %3276 = vmatpush1.bf16.msra.mxu0 %v3015
          %3277 = vmatprep.subr.bf16.mxu0 0
          %3278 = vmatpush1.bf16.msra.mxu0 %v3016
          %3279 = vmatprep.subr.bf16.mxu0 0
          %3280 = vmatpush1.bf16.msra.mxu0 %v3017
          %3281 = vmatprep.subr.bf16.mxu0 0
          %3282 = vmatpush1.bf16.msra.mxu0 %v3018
          %3283 = vmatprep.subr.bf16.mxu0 0
          %3284 = vmatpush1.bf16.msra.mxu0 %v3019
          %3285 = vmatprep.subr.bf16.mxu0 0
          %3286 = vmatpush1.bf16.msra.mxu0 %v3020
          %3287 = vmatprep.subr.bf16.mxu0 0
          %3288 = vmatpush1.bf16.msra.mxu0 %v3021
          %3289 = vmatprep.subr.bf16.mxu0 0
          %3290 = vmatpush1.bf16.msra.mxu0 %v3022
          %3291 = vmatprep.subr.bf16.mxu0 0
          %3292 = vmatpush1.bf16.msra.mxu0 %v3023
          %3293 = vmatprep.subr.bf16.mxu0 0
          %3294 = vmatpush1.bf16.msra.mxu0 %v3024
          %3295 = vmatprep.subr.bf16.mxu0 0
          %3296 = vmatpush1.bf16.msra.mxu0 %v3025
          %3297 = vmatprep.subr.bf16.mxu0 0
          %3298 = vmatpush1.bf16.msra.mxu0 %v3026
          %3299 = vmatprep.mubr.bf16.mxu0 %v2465
          %3300 = vmatmul.mubr.bf16.gmra.mrb[0].mxu0 %v2464
          %v3301 = vpop.f32.mrb[0].mxu0
          %v3302 = vadd.f32 %v3262, %v3301
          %v3303 = vpop.f32.mrb[0].mxu0
          %v3304 = vpop.f32.mrb[0].mxu0
          %v3305 = vpop.f32.mrb[0].mxu0
          %3306 = vdwg.mxu0
          %3307 = vst [vmem:[%s239] sm:$0x1] %v3302
        $region48: #{_lambda_.1} parent=39 // pred_fallthru
          _
        %s3308 = sand.u32 %s151, 1
        %s3309 = scalar_lea.sflag [#allocation4], %s3308
        %s3310 = sand.u32 %s151, 1
        %s3311 = scalar_lea.vmem [#allocation3], %s3310
        // Predicated region
        $region49: #{_lambda_.1} parent=39 // pred_check
          %p3312 = pneg %p161
        $region50: #{_lambda_.1} parent=39 // pred_check_branch
          %3314 = sbr.rel (%p3312) target = $region52
        $region51: #{_lambda_.1} parent=39 // pred_region
          %s3316 = ssub.s32 16, 16
          %3317 = vsyncadd %s3309, %s3316
          %s3318 = smul.addr %s23, 16
          %s3319 = scalar_lea.hbm %s5, %s3318
          %s3321 = sshll.u32 %s3311, 4
          %s3322 = int_to_ptr.vmem [resolvable:$true] %s3321
          %3324 = dma.vmem_to_hbm [thread:$0]  %s3322, 16, %s3319, %s3309
        $region52: #{_lambda_.1} parent=39 // pred_fallthru
          _
      $region40: #{_lambda_.1} parent=5 // pred_fallthru
        _
      %p3325 = scmp.le.s32.totalorder 2, %s14
      // Predicated region
      $region53: #{_lambda_.1} parent=5 // pred_check
        %p3326 = pneg %p3325
      $region54: #{_lambda_.1} parent=5 // pred_check_branch
        %3328 = sbr.rel (%p3326) target = $region56
      $region55: #{_lambda_.1} parent=5 // pred_region
        %s3329 = ssub.s32 %s14, 2
        // Predicated region
        $region57: #{_lambda_.1} parent=55 // pred_check
          %p3330 = pneg %p167
        $region58: #{_lambda_.1} parent=55 // pred_check_branch
          %3332 = sbr.rel (%p3330) target = $region60
        $region59: #{_lambda_.1} parent=55 // pred_region
          %s3333 = sand.u32 %s152, 1
          %s3334 = scalar_lea.sflag [#allocation4], %s3333
          %s3335 = sand.u32 %s152, 1
          %s3336 = scalar_lea.vmem [#allocation3], %s3335
          %3337 = dma.done %s3334, 16
        $region60: #{_lambda_.1} parent=55 // pred_fallthru
          _
      $region56: #{_lambda_.1} parent=5 // pred_fallthru
        _
    $region6: #{_lambda_.1} parent=1 // loop_footer
      %s18 = sadd.s32 1, %s14
    $region7: #{_lambda_.1} parent=1 // loop_footer_branch
      %13 = sbr.rel target = $region3
    $region8: #{_lambda_.1} parent=1 // loop_exit
      _
    %3338 = vsyncpa [#allocation4], 1
    %s3339 = scalar_lea.sflag [#allocation4], 1
    %3340 = vsyncpa %s3339, 1

</llo_original>
